<compile_context>
chip_gen: v7x
topology: tpu7x:2x2x1
jax: 0.10.0
libtpu: 0.0.40
codegen_flags: <defaults>
</compile_context>

<pallas_src>
import functools
import math

import jax
import jax.numpy as jnp
from jax import lax
from jax.experimental import pallas as pl
from jax.experimental.pallas import tpu as pltpu

_MASK_VALUE = -1e30  # exp(-1e30 - row_max) underflows to 0 in f32 (acts like -inf)


# -----------------------------------------------------------------------------
# Hardware-aware sizing (v5e/v6e: 128 MiB VMEM, v7x: 64 MiB per core).
# -----------------------------------------------------------------------------
def _vmem_capacity_bytes():
    try:
        return int(pltpu.get_tpu_info().vmem_capacity_bytes)
    except Exception:
        return 64 * 1024 * 1024  # conservative default (v7x physical per-core VMEM)


_VMEM_CAP = _vmem_capacity_bytes()
_VMEM_LIMIT = int(min(_VMEM_CAP * 3 // 4, 100 * 1024 * 1024))


def _pick_tile(n, candidates):
    for c in candidates:
        if c <= n and n % c == 0:
            return c
    return n  # full extent fallback (always a legal block size)


def _attn_q_tile(seq_len):
    # ~5 live (tq, S) f32 temporaries in the top-k loop; keep them well under a
    # quarter of physical VMEM so resident K/V + double buffering still fit.
    # (=> tq=256 on v5e/v6e up to S=4K, tq<=128 on v7x for S>=4K.)
    for tq in (256, 128, 64, 32, 16, 8):
        if seq_len % tq == 0 and 5 * tq * seq_len * 4 <= _VMEM_CAP // 4:
            return tq
    return seq_len


# -----------------------------------------------------------------------------
# Probe: does jnp.argmax lower inside a Pallas TPU kernel on this toolchain?
# (If not, fall back to an equivalent max + min-over-tied-columns pair.)
# -----------------------------------------------------------------------------
def _probe_argmax_kernel(x_ref, o_ref):
    x = x_ref[...]
    idx = jnp.argmax(x, axis=-1).astype(jnp.int32)[:, None]
    col = lax.broadcasted_iota(jnp.int32, x.shape, 1)
    o_ref[...] = jnp.where(col == idx, x, 0.0)


def _argmax_lowers():
    try:
        fn = pl.pallas_call(
            _probe_argmax_kernel,
            out_shape=jax.ShapeDtypeStruct((8, 128), jnp.float32))
        jax.jit(fn).lower(jax.ShapeDtypeStruct((8, 128), jnp.float32)).compile()
        return True
    except Exception:
        return False


_USE_ARGMAX = _argmax_lowers()


# -----------------------------------------------------------------------------
# Tiled matmul kernel (wq / wk / wv / wo projections).
# -----------------------------------------------------------------------------
def _matmul_kernel(a_ref, b_ref, o_ref, acc_ref):
    @pl.when(pl.program_id(2) == 0)
    def _():
        acc_ref[...] = jnp.zeros_like(acc_ref)

    # bf16 operands (MXU-native on v5e/v6e/v7x), f32 accumulation.
    acc_ref[...] += jnp.dot(a_ref[...].astype(jnp.bfloat16),
                            b_ref[...].astype(jnp.bfloat16),
                            preferred_element_type=jnp.float32)

    @pl.when(pl.program_id(2) == pl.num_programs(2) - 1)
    def _():
        o_ref[...] = acc_ref[...].astype(o_ref.dtype)


def pallas_matmul(a, b):
    M, K = a.shape
    K2, N = b.shape
    assert K == K2
    tm = _pick_tile(M, (512, 256, 128, 64, 32, 16, 8))
    tn = _pick_tile(N, (256, 128))
    tk = _pick_tile(K, (512, 256, 128))
    grid = (M // tm, N // tn, K // tk)
    return pl.pallas_call(
        _matmul_kernel,
        out_shape=jax.ShapeDtypeStruct((M, N), a.dtype),
        grid_spec=pltpu.PrefetchScalarGridSpec(
            num_scalar_prefetch=0,
            grid=grid,
            in_specs=[
                pl.BlockSpec((tm, tk), lambda i, j, k: (i, k)),
                pl.BlockSpec((tk, tn), lambda i, j, k: (k, j)),
            ],
            out_specs=pl.BlockSpec((tm, tn), lambda i, j, k: (i, j)),
            scratch_shapes=[pltpu.VMEM((tm, tn), jnp.float32)],
        ),
        compiler_params=pltpu.CompilerParams(
            dimension_semantics=("parallel", "parallel", "arbitrary"),
            vmem_limit_bytes=_VMEM_LIMIT,
        ),
    )(a, b)


# -----------------------------------------------------------------------------
# Sparse (top-k) causal attention core.  Kernel operates on 2-D tiles:
#   q_ref: (tq, hd)   k_ref / v_ref: (S, hd)   o_ref: (tq, hd)
# -----------------------------------------------------------------------------
def _sparse_attn_kernel(q_ref, k_ref, v_ref, o_ref, *, sm_scale, topk):
    qi = pl.program_id(1)
    q = q_ref[...].astype(jnp.float32) * sm_scale     # sm_scale folded into q
    k = k_ref[...].astype(jnp.float32)
    tq = q.shape[0]
    S = k.shape[0]

    # scores = (q * sm_scale) @ k^T, f32 accumulation on the MXU.  The score
    # matmul stays in f32 so the exact top-k selection matches the f32 torch
    # reference; the P @ V matmul below uses bf16 operands.
    scores = lax.dot_general(q, k, (((1,), (1,)), ((), ())),
                             preferred_element_type=jnp.float32)      # (tq, S)

    # Causal mask.
    row = qi * tq + lax.broadcasted_iota(jnp.int32, (tq, S), 0)
    col = lax.broadcasted_iota(jnp.int32, (tq, S), 1)
    scores = jnp.where(col <= row, scores, _MASK_VALUE)
    # TODO(synk): skip QK^T / mask work for key chunks that are fully causally
    # masked for this query tile (only keys < (qi+1)*tq matter) -- secondary win.

    if not _USE_ARGMAX:
        col_f = col.astype(jnp.float32)
        big_idx = jnp.float32(S)

    # Exact top-k along the key axis: iteratively pick the row maximum
    # (ties -> lowest index, matching torch.topk + scatter-into-zeros with a
    # stable order) and accumulate the selected scores directly; non-selected
    # positions stay 0.  Loop is unrolled (topk is a small static constant).
    def select_one(_, carry):
        cand, selected = carry
        if _USE_ARGMAX:
            idx = jnp.argmax(cand, axis=-1).astype(jnp.int32)[:, None]
            sel = col == idx
        else:
            row_max = jnp.max(cand, axis=-1, keepdims=True)
            tie_col = jnp.where(cand == row_max, col_f, big_idx)
            sel = col_f == jnp.min(tie_col, axis=-1, keepdims=True)
        selected = jnp.where(sel, cand, selected)
        cand = jnp.where(sel, -jnp.inf, cand)        # remove from future rounds
        return cand, selected

    _, sparse = lax.fori_loop(0, topk, select_one,
                              (scores, jnp.zeros_like(scores)), unroll=True)

    # Full-row softmax in f32 (non-selected zeros participate, per the spec);
    # the divide goes through the otherwise-idle EUP reciprocal.
    row_max = jnp.max(sparse, axis=-1, keepdims=True)
    e = jnp.exp(sparse - row_max)
    denom = jnp.sum(e, axis=-1, keepdims=True)
    p = (e * pl.reciprocal(denom, approx=True)).astype(jnp.bfloat16)

    out = jnp.dot(p, v_ref[...].astype(jnp.bfloat16),
                  preferred_element_type=jnp.float32)
    o_ref[...] = out.astype(o_ref.dtype)


def _attn_pallas_call(kernel, grid, in_specs, out_specs, out_shape):
    return pl.pallas_call(
        kernel,
        out_shape=out_shape,
        grid_spec=pltpu.PrefetchScalarGridSpec(
            num_scalar_prefetch=0, grid=grid,
            in_specs=in_specs, out_specs=out_specs),
        compiler_params=pltpu.CompilerParams(
            # Megacore split on the batch*head axis only: splitting the query
            # tile axis would make both cores DMA the same full-length K/V.
            dimension_semantics=("parallel", "arbitrary"),
            vmem_limit_bytes=_VMEM_LIMIT,
        ),
    )


def sparse_attention_core(q, k, v, *, batch, seq_len, n_heads, head_dim,
                          topk, sm_scale):
    """q, k, v: (batch*seq_len, n_heads*head_dim) projection outputs."""
    kk = min(topk, seq_len)
    tq = _attn_q_tile(seq_len)
    assert seq_len % tq == 0
    n_q = seq_len // tq
    H = n_heads
    kernel = functools.partial(_sparse_attn_kernel, sm_scale=sm_scale, topk=kk)

    if head_dim % 128 == 0:
        # Flat layout: per-(batch, head) tiles are carved directly out of the
        # (B*S, H*hd) projection output via BlockSpec index maps -> no
        # head-split transposes through HBM, lane-dense (>=128) output stores,
        # and the wo matmul consumes the result directly.
        qo_spec = pl.BlockSpec((tq, head_dim),
                               lambda bh, i: ((bh // H) * n_q + i, bh % H))
        kv_spec = pl.BlockSpec((seq_len, head_dim),
                               lambda bh, i: (bh // H, bh % H))
        call = _attn_pallas_call(
            kernel, (batch * H, n_q), [qo_spec, kv_spec, kv_spec], qo_spec,
            jax.ShapeDtypeStruct(q.shape, q.dtype))
        return call(q, k, v)

    # Fallback for head_dim not a multiple of 128 (e.g. 64): split heads in
    # HBM (XLA transposes) and run the same kernel on a (B*H, S, hd) layout.
    def split(t):
        return (t.reshape(batch, seq_len, H, head_dim)
                 .transpose(0, 2, 1, 3)
                 .reshape(batch * H, seq_len, head_dim))

    q3, k3, v3 = split(q), split(k), split(v)
    qo_spec = pl.BlockSpec((None, tq, head_dim), lambda b, i: (b, i, 0))
    kv_spec = pl.BlockSpec((None, seq_len, head_dim), lambda b, i: (b, 0, 0))
    call = _attn_pallas_call(
        kernel, (batch * H, n_q), [qo_spec, kv_spec, kv_spec], qo_spec,
        jax.ShapeDtypeStruct(q3.shape, q3.dtype))
    out3 = call(q3, k3, v3)
    return (out3.reshape(batch, H, seq_len, head_dim)
                .transpose(0, 2, 1, 3)
                .reshape(batch * seq_len, H * head_dim))


# -----------------------------------------------------------------------------
# Full SparseAttention forward.
# -----------------------------------------------------------------------------
def sparse_attention_forward(x, wq, wk, wv, wo, *, n_heads, n_kv_heads, topk):
    B, S, dim = x.shape
    # The torch module's matmul requires n_heads == n_kv_heads (no GQA broadcast).
    assert n_heads == n_kv_heads
    head_dim = dim // n_heads
    x2 = x.reshape(B * S, dim)

    q = pallas_matmul(x2, wq)
    k = pallas_matmul(x2, wk)
    v = pallas_matmul(x2, wv)

    attn = sparse_attention_core(
        q, k, v, batch=B, seq_len=S, n_heads=n_heads, head_dim=head_dim,
        topk=topk, sm_scale=1.0 / math.sqrt(head_dim))

    out = pallas_matmul(attn, wo)
    # TODO(synk): attn_dropout / resid_dropout omitted (args.dropout defaults to 0.0).
    # TODO(synk): use_block_sparsity=True branch not implemented (args.use_block=False).
    return out.reshape(B, S, dim)


# -----------------------------------------------------------------------------
# Pure-JAX reference (mirrors the PyTorch forward; ties -> lowest index).
# -----------------------------------------------------------------------------
def _reference_forward(x, wq, wk, wv, wo, *, n_heads, topk):
    hi = lax.Precision.HIGHEST
    B, S, dim = x.shape
    hd = dim // n_heads
    x2 = x.reshape(B * S, dim)

    def proj(w):
        return (jnp.einsum("md,dn->mn", x2, w, precision=hi)
                .reshape(B, S, n_heads, hd).transpose(0, 2, 1, 3))

    q, k, v = proj(wq), proj(wk), proj(wv)
    scores = jnp.einsum("bhqd,bhkd->bhqk", q, k, precision=hi) / math.sqrt(hd)
    mask = jnp.triu(jnp.full((S, S), -jnp.inf, dtype=scores.dtype), k=1)
    scores = scores + mask[None, None]

    kk = min(topk, S)
    order = jnp.argsort(-scores, axis=-1, stable=True)   # descending, stable
    rank = jnp.argsort(order, axis=-1, stable=True)      # rank of each position
    sparse = jnp.where(rank < kk, scores, 0.0)            # scatter-into-zeros

    probs = jax.nn.softmax(sparse.astype(jnp.float32), axis=-1).astype(q.dtype)
    out = jnp.einsum("bhqk,bhkd->bhqd", probs, v, precision=hi)
    out = out.transpose(0, 2, 1, 3).reshape(B * S, n_heads * hd)
    return jnp.einsum("mn,nd->md", out, wo, precision=hi).reshape(B, S, dim)


if __name__ == "__main__":
    key = jax.random.PRNGKey(0)
    batch, seq_len = 2, 128
    n_heads = n_kv_heads = 2
    head_dim = 256                  # multiple of 128 -> flat no-transpose path with
                                    # lane-dense stores; sqrt(256)=16 is a power of
                                    # two so folding sm_scale into q stays exact.
    dim = n_heads * head_dim        # 512
    topk = 24                       # module default; < seq_len, exercises sparsity

    kx, kq, kkey, kv, ko = jax.random.split(key, 5)

    def grid_vals(k, shape, scale):
        # Values on a coarse grid ({-1,0,1} * power-of-two scale) so every matmul
        # feeding the top-k selection is exact in f32 (and in bf16 where cast);
        # the kernel's selection then provably matches the reference's.
        return (jnp.round(jnp.clip(jax.random.normal(k, shape), -1.0, 1.0))
                * scale).astype(jnp.float32)

    x = grid_vals(kx, (batch, seq_len, dim), 1.0)
    wq = grid_vals(kq, (dim, n_heads * head_dim), 1.0 / 16.0)
    wk = grid_vals(kkey, (dim, n_kv_heads * head_dim), 1.0 / 16.0)
    wv = grid_vals(kv, (dim, n_kv_heads * head_dim), 1.0 / 16.0)
    wo = grid_vals(ko, (n_heads * head_dim, dim), 1.0 / 16.0)

    y = sparse_attention_forward(x, wq, wk, wv, wo,
                                 n_heads=n_heads, n_kv_heads=n_kv_heads, topk=topk)
    y = jax.block_until_ready(y)

    ref = jax.block_until_ready(
        _reference_forward(x, wq, wk, wv, wo, n_heads=n_heads, topk=topk))

    assert y.shape == (batch, seq_len, dim)
    max_err = float(jnp.max(jnp.abs(y - ref)))
    # bf16 MXU operands (P@V, wo) and the approx reciprocal give ~1e-2-level
    # error; selection/mask/layout bugs would be orders of magnitude larger.
    assert jnp.allclose(y, ref, atol=2.5e-2, rtol=2.5e-2), (
        f"mismatch vs reference: {max_err}")
    print("KERNEL_OK")
</pallas_src>

<mosaic_0001>
module attributes {stable_mosaic.version = 11 : i64} {
  func.func @_matmul_kernel(%arg0: i32, %arg1: i32, %arg2: i32, %arg3: memref<256x512xf32, #tpu.memory_space<vmem>>, %arg4: memref<512x256xf32, #tpu.memory_space<vmem>>, %arg5: memref<256x256xf32, #tpu.memory_space<vmem>>, %arg6: memref<256x256xf32, #tpu.memory_space<vmem>>) attributes {dimension_semantics = [#tpu.dimension_semantics<parallel>, #tpu.dimension_semantics<parallel>, #tpu.dimension_semantics<arbitrary>], iteration_bounds = array<i64: 1, 2, 1>, scalar_prefetch = 0 : i64, scratch_operands = 1 : i64, tpu.core_type = #tpu.core_type<tc>, window_params = [{transform_indices = @transform_0, window_bounds = array<i64: 256, 512>}, {transform_indices = @transform_1, window_bounds = array<i64: 512, 256>}, {transform_indices = @transform_2, window_bounds = array<i64: 256, 256>}]} {
    %c0_i32 = arith.constant 0 : i32
    %0 = arith.cmpi eq, %arg2, %c0_i32 : i32
    %1 = arith.extui %0 : i1 to i32
    %c0_i32_0 = arith.constant 0 : i32
    %2 = arith.cmpi ne, %1, %c0_i32_0 : i32
    scf.if %2 {
      %cst_10 = arith.constant 0.000000e+00 : f32
      %14 = vector.broadcast %cst_10 : f32 to vector<256x256xf32>
      %c0_11 = arith.constant 0 : index
      %c0_12 = arith.constant 0 : index
      %15 = vector.load %arg6[%c0_11, %c0_12] : memref<256x256xf32, #tpu.memory_space<vmem>>, vector<256x256xf32>
      tpu.vector_store %arg6[%c0_11, %c0_12], %14 {strides = array<i32>} : memref<256x256xf32, #tpu.memory_space<vmem>>, vector<256x256xf32>,
    } else {
    }
    %c0 = arith.constant 0 : index
    %c0_1 = arith.constant 0 : index
    %3 = vector.load %arg6[%c0, %c0_1] : memref<256x256xf32, #tpu.memory_space<vmem>>, vector<256x256xf32>
    %c0_2 = arith.constant 0 : index
    %c0_3 = arith.constant 0 : index
    %4 = vector.load %arg3[%c0_2, %c0_3] : memref<256x512xf32, #tpu.memory_space<vmem>>, vector<256x512xf32>
    %5 = arith.truncf %4 : vector<256x512xf32> to vector<256x512xbf16>
    %c0_4 = arith.constant 0 : index
    %c0_5 = arith.constant 0 : index
    %6 = vector.load %arg4[%c0_4, %c0_5] : memref<512x256xf32, #tpu.memory_space<vmem>>, vector<512x256xf32>
    %7 = arith.truncf %6 : vector<512x256xf32> to vector<512x256xbf16>
    %cst = arith.constant dense<0.000000e+00> : vector<256x256xf32>
    %8 = tpu.matmul %5, %7, %cst {dimension_numbers = #tpu.dot_dimension_numbers<[1], [0], [0], [1], [0, 0, 1, 1], [], []>} : vector<256x512xbf16>, vector<512x256xbf16>, vector<256x256xf32> -> vector<256x256xf32>
    %9 = arith.addf %3, %8 : vector<256x256xf32>
    %c0_6 = arith.constant 0 : index
    %c0_7 = arith.constant 0 : index
    %10 = vector.load %arg6[%c0_6, %c0_7] : memref<256x256xf32, #tpu.memory_space<vmem>>, vector<256x256xf32>
    tpu.vector_store %arg6[%c0_6, %c0_7], %9 {strides = array<i32>} : memref<256x256xf32, #tpu.memory_space<vmem>>, vector<256x256xf32>,
    %c0_i32_8 = arith.constant 0 : i32
    %11 = arith.cmpi eq, %arg2, %c0_i32_8 : i32
    %12 = arith.extui %11 : i1 to i32
    %c0_i32_9 = arith.constant 0 : i32
    %13 = arith.cmpi ne, %12, %c0_i32_9 : i32
    scf.if %13 {
      %c0_10 = arith.constant 0 : index
      %c0_11 = arith.constant 0 : index
      %14 = vector.load %arg6[%c0_10, %c0_11] : memref<256x256xf32, #tpu.memory_space<vmem>>, vector<256x256xf32>
      %c0_12 = arith.constant 0 : index
      %c0_13 = arith.constant 0 : index
      %15 = vector.load %arg5[%c0_12, %c0_13] : memref<256x256xf32, #tpu.memory_space<vmem>>, vector<256x256xf32>
      tpu.vector_store %arg5[%c0_12, %c0_13], %14 {strides = array<i32>} : memref<256x256xf32, #tpu.memory_space<vmem>>, vector<256x256xf32>,
    } else {
    }
    return
  }
  func.func @transform_0(%arg0: i32, %arg1: i32, %arg2: i32) -> (i32, i32) {
    %c0_i32 = arith.constant 0 : i32
    return %arg0, %arg2 : i32, i32
  }
  func.func @transform_1(%arg0: i32, %arg1: i32, %arg2: i32) -> (i32, i32) {
    %c0_i32 = arith.constant 0 : i32
    return %arg2, %arg1 : i32, i32
  }
  func.func @transform_2(%arg0: i32, %arg1: i32, %arg2: i32) -> (i32, i32) {
    %c0_i32 = arith.constant 0 : i32
    return %arg0, %arg1 : i32, i32
  }
}

</mosaic_0001>

<llo_original>
// kernel: tpu_custom_call.1
$region0: #{tpu_custom_call.1}
  #allocation0 [shape = 'u32[]', space=smem, size = 0x4, offset = 0x4, fixed_abs, tag = 'smem constant byte address 0x4 - core index']
  #allocation1 [shape = 'u32[144,128]{1,0:T(1,128)}', space=vmem, size = 0x12000, scoped, tag = 'internal scratch']
  #allocation2 [shape = 'f32[256,256]{1,0:T(8,128)}', space=vmem, size = 0x40000, scoped, tag = 'scratch operand']
  %s0 = inlined_call_operand.hbm [shape: f32[256,512], index: 0, kind: input, shape index: {}]
  %s1 = inlined_call_operand.hbm [shape: f32[512,512], index: 1, kind: input, shape index: {}]
  %s2 = inlined_call_operand.hbm [shape: f32[256,512], index: 2, kind: output, shape index: {}]
  %s3 = sld [smem:[#allocation0]]
  $region57: #{tpu_custom_call.1} parent=0
    _
  %s5 = ssub.s32 1, %s3
  %s6 = scalar_select 0, %s5, %s3
  $region1: #{tpu_custom_call.1} parent=0
    #allocation3 [shape = 'u8[524288]{0}', space=vmem, size = 0x80000, scoped, tag = 'input window, operand 0, single buffered']
    #allocation4 [shape = 's32[2]{0}', space=sflag, size = 0x8, scoped, tag = 'scoped memory for tpu_custom_call.1']
    #allocation5 [shape = 's32[2]{0}', space=sflag, size = 0x8, scoped, tag = 'scoped memory for tpu_custom_call.1']
    #allocation6 [shape = 'u8[1048576]{0}', space=vmem, size = 0x100000, scoped, tag = 'input window, operand 1']
    #allocation7 [shape = 's32[2]{0}', space=sflag, size = 0x8, scoped, tag = 'scoped memory for tpu_custom_call.1']
    #allocation8 [shape = 'u8[524288]{0}', space=vmem, size = 0x80000, scoped, tag = 'output window, operand 0']
    %7 = vsyncpa [#allocation4], 0
    %8 = vsyncpa [#allocation7], 0
    %s9 = scalar_lea.sflag [#allocation7], 1
    %10 = vsyncpa %s9, 0
    %11 = vsyncpa [#allocation5], 0
    %s12 = scalar_lea.sflag [#allocation5], 1
    %13 = vsyncpa %s12, 0
    loop: start=0, step=1, limit=4
    $region2: #{tpu_custom_call.1} parent=1 // loop_pre_header
      _
    $region3: #{tpu_custom_call.1} parent=1 // loop_header
      %s15 = sphi 0, %s19
      %p16 = scmp.ge.s32.totalorder %s15, 4
      %s22 = sphi 0, %s41
      %s23 = sphi 0, %s37
      %s24 = sphi 0, %s33
      %s25 = sphi 0, %s22
      %s26 = sphi 0, %s23
      %s27 = sphi 0, %s24
      %s28 = sphi 0, %s25
      %s29 = sphi 0, %s26
      %s30 = sphi 0, %s27
      %s46 = sphi 0, %s48
      %s49 = sphi 0, %s46
      %s50 = sphi 0, %s49
      %s66 = sphi 0, %s50
      %s74 = sphi 0, %s76
      %s77 = sphi 0, %s74
      %s78 = sphi 0, %s77
      %s94 = sphi 0, %s78
      %s102 = sphi 0, %s104
      %s105 = sphi 0, %s102
      %s106 = sphi 0, %s105
      %s122 = sphi 0, %s106
    $region4: #{tpu_custom_call.1} parent=1 // loop_header_branch
      %18 = sbr.rel (%p16) target = $region8
    $region5: #{tpu_custom_call.1} parent=1 // loop_body
      %s20 = ssub.s32 %s15, 1
      %s21 = ssub.s32 %s15, 2
      %s31 = sadd.s32 1, %s24
      %p32 = scmp.ge.s32.totalorder %s31, 1
      %s33 = scalar_select %p32, 0, %s31
      %s34 = sadd.s32 1, %s23
      %s35 = scalar_select %p32, %s34, %s23
      %p36 = scmp.ge.s32.totalorder %s35, 2
      %s37 = scalar_select %p36, 0, %s35
      %s38 = sadd.s32 1, %s22
      %s39 = scalar_select %p36, %s38, %s22
      %p40 = scmp.ge.s32.totalorder %s39, 1
      %s41 = scalar_select %p40, 0, %s39
      %s42 = ssub.s32 %s22, %s41
      %s43 = ssub.s32 %s24, %s33
      %s44 = sor.u32 %s42, %s43
      %p45 = scmp.eq.s32.totalorder %s44, 0
      %s47 = sadd.s32 %s46, 1
      %s48 = scalar_select %p45, %s46, %s47
      %p51 = pneg %p45
      %p52 = scmp.eq.s32.totalorder %s15, 1
      %p53 = por %p51, %p52
      %p54 = scmp.ne.s32.totalorder %s46, %s49
      %p55 = scmp.eq.s32.totalorder %s15, 0
      %p56 = por %p54, %p55
      %p57 = scmp.ne.s32.totalorder %s46, %s49
      %p58 = scmp.eq.s32.totalorder %s20, 1
      %p59 = por %p57, %p58
      %p60 = scmp.ne.s32.totalorder %s49, %s50
      %p61 = scmp.eq.s32.totalorder %s20, 0
      %p62 = por %p60, %p61
      %p63 = scmp.ne.s32.totalorder %s49, %s50
      %p64 = scmp.eq.s32.totalorder %s21, 1
      %p65 = por %p63, %p64
      %p67 = scmp.ne.s32.totalorder %s50, %s66
      %p68 = scmp.eq.s32.totalorder %s21, 0
      %p69 = por %p67, %p68
      %s70 = ssub.s32 %s24, %s33
      %s71 = ssub.s32 %s23, %s37
      %s72 = sor.u32 %s70, %s71
      %p73 = scmp.eq.s32.totalorder %s72, 0
      %s75 = sadd.s32 %s74, 1
      %s76 = scalar_select %p73, %s74, %s75
      %p79 = pneg %p73
      %p80 = scmp.eq.s32.totalorder %s15, 1
      %p81 = por %p79, %p80
      %p82 = scmp.ne.s32.totalorder %s74, %s77
      %p83 = scmp.eq.s32.totalorder %s15, 0
      %p84 = por %p82, %p83
      %p85 = scmp.ne.s32.totalorder %s74, %s77
      %p86 = scmp.eq.s32.totalorder %s20, 1
      %p87 = por %p85, %p86
      %p88 = scmp.ne.s32.totalorder %s77, %s78
      %p89 = scmp.eq.s32.totalorder %s20, 0
      %p90 = por %p88, %p89
      %p91 = scmp.ne.s32.totalorder %s77, %s78
      %p92 = scmp.eq.s32.totalorder %s21, 1
      %p93 = por %p91, %p92
      %p95 = scmp.ne.s32.totalorder %s78, %s94
      %p96 = scmp.eq.s32.totalorder %s21, 0
      %p97 = por %p95, %p96
      %s98 = ssub.s32 %s22, %s41
      %s99 = ssub.s32 %s23, %s37
      %s100 = sor.u32 %s98, %s99
      %p101 = scmp.eq.s32.totalorder %s100, 0
      %s103 = sadd.s32 %s102, 1
      %s104 = scalar_select %p101, %s102, %s103
      %p107 = pneg %p101
      %p108 = scmp.eq.s32.totalorder %s15, 1
      %p109 = por %p107, %p108
      %p110 = scmp.ne.s32.totalorder %s102, %s105
      %p111 = scmp.eq.s32.totalorder %s15, 0
      %p112 = por %p110, %p111
      %p113 = scmp.ne.s32.totalorder %s102, %s105
      %p114 = scmp.eq.s32.totalorder %s20, 1
      %p115 = por %p113, %p114
      %p116 = scmp.ne.s32.totalorder %s105, %s106
      %p117 = scmp.eq.s32.totalorder %s20, 0
      %p118 = por %p116, %p117
      %p119 = scmp.ne.s32.totalorder %s105, %s106
      %p120 = scmp.eq.s32.totalorder %s21, 1
      %p121 = por %p119, %p120
      %p123 = scmp.ne.s32.totalorder %s106, %s122
      %p124 = scmp.eq.s32.totalorder %s21, 0
      %p125 = por %p123, %p124
      %p126 = scmp.le.s32.totalorder 1, %s15
      %p127 = scmp.lt.s32.totalorder %s15, 3
      %p128 = pnand %p126, %p127
      %p129 = pneg %p128
      // Predicated region
      $region9: #{tpu_custom_call.1} parent=5 // pred_check
        _
      $region10: #{tpu_custom_call.1} parent=5 // pred_check_branch
        %131 = sbr.rel (%p128) target = $region12
      $region11: #{tpu_custom_call.1} parent=5 // pred_region
        %s132 = ssub.s32 %s15, 1
        // Predicated region
        $region13: #{tpu_custom_call.1} parent=11 // pred_check
          %p133 = pneg %p62
        $region14: #{tpu_custom_call.1} parent=11 // pred_check_branch
          %135 = sbr.rel (%p133) target = $region16
        $region15: #{tpu_custom_call.1} parent=11 // pred_region
          %s136 = smul.u32 32, %s25
          %s137 = smul.u32 4, %s27
          %s139 = ssub.s32 16384, 16384
          %140 = vsyncadd [#allocation4], %s139
          %s141 = smul.addr %s136, 4
          %s142 = sadd.s32 %s137, %s141
          %s143 = smul.addr %s142, 128
          %s144 = scalar_lea.hbm %s0, %s143
          %s145 = sshll.u32 [#allocation3], 4
          %s146 = int_to_ptr.vmem [resolvable:$true] %s145
          %151 = dma.hbm_to_vmem [thread:$0]  %s144, 16384, %s146, [#allocation4], 512, 512, 32
        $region16: #{tpu_custom_call.1} parent=11 // pred_fallthru
          _
      $region12: #{tpu_custom_call.1} parent=5 // pred_fallthru
        _
      %p152 = scmp.lt.s32.totalorder %s15, 2
      // Predicated region
      $region17: #{tpu_custom_call.1} parent=5 // pred_check
        %p153 = pneg %p152
      $region18: #{tpu_custom_call.1} parent=5 // pred_check_branch
        %155 = sbr.rel (%p153) target = $region20
      $region19: #{tpu_custom_call.1} parent=5 // pred_region
        // Predicated region
        $region21: #{tpu_custom_call.1} parent=19 // pred_check
          %p156 = pneg %p84
        $region22: #{tpu_custom_call.1} parent=19 // pred_check_branch
          %158 = sbr.rel (%p156) target = $region24
        $region23: #{tpu_custom_call.1} parent=19 // pred_region
          %s159 = sand.u32 %s74, 1
          %s160 = scalar_lea.sflag [#allocation7], %s159
          %s161 = sand.u32 %s74, 1
          %s162 = smul.addr %s161, 1024
          %s163 = scalar_lea.vmem [#allocation6], %s162
          %s164 = smul.u32 64, %s24
          %s165 = smul.u32 2, %s23
          %s167 = ssub.s32 16384, 16384
          %168 = vsyncadd %s160, %s167
          %s169 = smul.addr %s164, 4
          %s170 = sadd.s32 %s165, %s169
          %s171 = smul.addr %s170, 128
          %s172 = scalar_lea.hbm %s1, %s171
          %s173 = sshll.u32 %s163, 4
          %s174 = int_to_ptr.vmem [resolvable:$true] %s173
          %179 = dma.hbm_to_vmem [thread:$0]  %s172, 16384, %s174, %s160, 512, 256, 16
        $region24: #{tpu_custom_call.1} parent=19 // pred_fallthru
          _
      $region20: #{tpu_custom_call.1} parent=5 // pred_fallthru
        _
      %p180 = scmp.le.s32.totalorder 1, %s15
      %p181 = scmp.lt.s32.totalorder %s15, 3
      %p182 = pnand %p180, %p181
      %p183 = pneg %p182
      // Predicated region
      $region25: #{tpu_custom_call.1} parent=5 // pred_check
        _
      $region26: #{tpu_custom_call.1} parent=5 // pred_check_branch
        %185 = sbr.rel (%p182) target = $region28
      $region27: #{tpu_custom_call.1} parent=5 // pred_region
        %s186 = ssub.s32 %s15, 1
        // Predicated region
        $region29: #{tpu_custom_call.1} parent=27 // pred_check
          %p187 = pneg %p62
        $region30: #{tpu_custom_call.1} parent=27 // pred_check_branch
          %189 = sbr.rel (%p187) target = $region32
        $region31: #{tpu_custom_call.1} parent=27 // pred_region
          %190 = dma.done [#allocation4], 16384
        $region32: #{tpu_custom_call.1} parent=27 // pred_fallthru
          _
        %s191 = sand.u32 %s77, 1
        %s192 = scalar_lea.sflag [#allocation7], %s191
        %s193 = sand.u32 %s77, 1
        %s194 = smul.addr %s193, 1024
        %s195 = scalar_lea.vmem [#allocation6], %s194
        // Predicated region
        $region33: #{tpu_custom_call.1} parent=27 // pred_check
          %p196 = pneg %p90
        $region34: #{tpu_custom_call.1} parent=27 // pred_check_branch
          %198 = sbr.rel (%p196) target = $region36
        $region35: #{tpu_custom_call.1} parent=27 // pred_region
          %199 = dma.done %s192, 16384
        $region36: #{tpu_custom_call.1} parent=27 // pred_fallthru
          _
        %p200 = pneg %p62
        %p201 = pneg %p59
        %s202 = sand.u32 %s77, 1
        %s203 = scalar_lea.sflag [#allocation7], %s202
        %s204 = sand.u32 %s77, 1
        %s205 = smul.addr %s204, 1024
        %s206 = scalar_lea.vmem [#allocation6], %s205
        %p207 = pneg %p90
        %p208 = pneg %p87
        %p209 = pneg %p118
        %p210 = pneg %p115
        %s211 = sand.u32 %s105, 1
        %s212 = scalar_lea.sflag [#allocation5], %s211
        %s213 = sand.u32 %s105, 1
        %s214 = smul.addr %s213, 512
        %s215 = scalar_lea.vmem [#allocation8], %s214
        %s216 = smul.u32 32, %s25
        %s217 = smul.u32 4, %s27
        %s218 = smul.u32 64, %s27
        %s219 = smul.u32 2, %s26
        %s220 = smul.u32 32, %s25
        %s221 = smul.u32 2, %s26
        %p222 = scmp.eq.s32.totalorder %s27, 0
        // Predicated region
        $region37: #{tpu_custom_call.1} parent=27 // pred_check
          %p223 = pneg %p222
        $region38: #{tpu_custom_call.1} parent=27 // pred_check_branch
          %225 = sbr.rel (%p223) target = $region40
        $region39: #{tpu_custom_call.1} parent=27 // pred_region
          %226 = vst [vmem:[#allocation2] sm:$0xff] 0.0
          %227 = vst [vmem:[#allocation2 + $0x8] sm:$0xff] 0.0
          %228 = vst [vmem:[#allocation2 + $0x10] sm:$0xff] 0.0
          %229 = vst [vmem:[#allocation2 + $0x18] sm:$0xff] 0.0
          %230 = vst [vmem:[#allocation2 + $0x20] sm:$0xff] 0.0
          %231 = vst [vmem:[#allocation2 + $0x28] sm:$0xff] 0.0
          %232 = vst [vmem:[#allocation2 + $0x30] sm:$0xff] 0.0
          %233 = vst [vmem:[#allocation2 + $0x38] sm:$0xff] 0.0
          %234 = vst [vmem:[#allocation2 + $0x40] sm:$0xff] 0.0
          %235 = vst [vmem:[#allocation2 + $0x48] sm:$0xff] 0.0
          %236 = vst [vmem:[#allocation2 + $0x50] sm:$0xff] 0.0
          %237 = vst [vmem:[#allocation2 + $0x58] sm:$0xff] 0.0
          %238 = vst [vmem:[#allocation2 + $0x60] sm:$0xff] 0.0
          %239 = vst [vmem:[#allocation2 + $0x68] sm:$0xff] 0.0
          %240 = vst [vmem:[#allocation2 + $0x70] sm:$0xff] 0.0
          %241 = vst [vmem:[#allocation2 + $0x78] sm:$0xff] 0.0
          %242 = vst [vmem:[#allocation2 + $0x80] sm:$0xff] 0.0
          %243 = vst [vmem:[#allocation2 + $0x88] sm:$0xff] 0.0
          %244 = vst [vmem:[#allocation2 + $0x90] sm:$0xff] 0.0
          %245 = vst [vmem:[#allocation2 + $0x98] sm:$0xff] 0.0
          %246 = vst [vmem:[#allocation2 + $0xa0] sm:$0xff] 0.0
          %247 = vst [vmem:[#allocation2 + $0xa8] sm:$0xff] 0.0
          %248 = vst [vmem:[#allocation2 + $0xb0] sm:$0xff] 0.0
          %249 = vst [vmem:[#allocation2 + $0xb8] sm:$0xff] 0.0
          %250 = vst [vmem:[#allocation2 + $0xc0] sm:$0xff] 0.0
          %251 = vst [vmem:[#allocation2 + $0xc8] sm:$0xff] 0.0
          %252 = vst [vmem:[#allocation2 + $0xd0] sm:$0xff] 0.0
          %253 = vst [vmem:[#allocation2 + $0xd8] sm:$0xff] 0.0
          %254 = vst [vmem:[#allocation2 + $0xe0] sm:$0xff] 0.0
          %255 = vst [vmem:[#allocation2 + $0xe8] sm:$0xff] 0.0
          %256 = vst [vmem:[#allocation2 + $0xf0] sm:$0xff] 0.0
          %257 = vst [vmem:[#allocation2 + $0xf8] sm:$0xff] 0.0
          %258 = vst [vmem:[#allocation2 + $0x100] sm:$0xff] 0.0
          %259 = vst [vmem:[#allocation2 + $0x108] sm:$0xff] 0.0
          %260 = vst [vmem:[#allocation2 + $0x110] sm:$0xff] 0.0
          %261 = vst [vmem:[#allocation2 + $0x118] sm:$0xff] 0.0
          %262 = vst [vmem:[#allocation2 + $0x120] sm:$0xff] 0.0
          %263 = vst [vmem:[#allocation2 + $0x128] sm:$0xff] 0.0
          %264 = vst [vmem:[#allocation2 + $0x130] sm:$0xff] 0.0
          %265 = vst [vmem:[#allocation2 + $0x138] sm:$0xff] 0.0
          %266 = vst [vmem:[#allocation2 + $0x140] sm:$0xff] 0.0
          %267 = vst [vmem:[#allocation2 + $0x148] sm:$0xff] 0.0
          %268 = vst [vmem:[#allocation2 + $0x150] sm:$0xff] 0.0
          %269 = vst [vmem:[#allocation2 + $0x158] sm:$0xff] 0.0
          %270 = vst [vmem:[#allocation2 + $0x160] sm:$0xff] 0.0
          %271 = vst [vmem:[#allocation2 + $0x168] sm:$0xff] 0.0
          %272 = vst [vmem:[#allocation2 + $0x170] sm:$0xff] 0.0
          %273 = vst [vmem:[#allocation2 + $0x178] sm:$0xff] 0.0
          %274 = vst [vmem:[#allocation2 + $0x180] sm:$0xff] 0.0
          %275 = vst [vmem:[#allocation2 + $0x188] sm:$0xff] 0.0
          %276 = vst [vmem:[#allocation2 + $0x190] sm:$0xff] 0.0
          %277 = vst [vmem:[#allocation2 + $0x198] sm:$0xff] 0.0
          %278 = vst [vmem:[#allocation2 + $0x1a0] sm:$0xff] 0.0
          %279 = vst [vmem:[#allocation2 + $0x1a8] sm:$0xff] 0.0
          %280 = vst [vmem:[#allocation2 + $0x1b0] sm:$0xff] 0.0
          %281 = vst [vmem:[#allocation2 + $0x1b8] sm:$0xff] 0.0
          %282 = vst [vmem:[#allocation2 + $0x1c0] sm:$0xff] 0.0
          %283 = vst [vmem:[#allocation2 + $0x1c8] sm:$0xff] 0.0
          %284 = vst [vmem:[#allocation2 + $0x1d0] sm:$0xff] 0.0
          %285 = vst [vmem:[#allocation2 + $0x1d8] sm:$0xff] 0.0
          %286 = vst [vmem:[#allocation2 + $0x1e0] sm:$0xff] 0.0
          %287 = vst [vmem:[#allocation2 + $0x1e8] sm:$0xff] 0.0
          %288 = vst [vmem:[#allocation2 + $0x1f0] sm:$0xff] 0.0
          %289 = vst [vmem:[#allocation2 + $0x1f8] sm:$0xff] 0.0
        $region40: #{tpu_custom_call.1} parent=27 // pred_fallthru
          _
        %v290 = vld [vmem:[#allocation2] sm:$0xff]
        %v291 = vld [vmem:[#allocation2 + $0x8] sm:$0xff]
        %v292 = vld [vmem:[#allocation2 + $0x10] sm:$0xff]
        %v293 = vld [vmem:[#allocation2 + $0x18] sm:$0xff]
        %v294 = vld [vmem:[#allocation2 + $0x20] sm:$0xff]
        %v295 = vld [vmem:[#allocation2 + $0x28] sm:$0xff]
        %v296 = vld [vmem:[#allocation2 + $0x30] sm:$0xff]
        %v297 = vld [vmem:[#allocation2 + $0x38] sm:$0xff]
        %v298 = vld [vmem:[#allocation2 + $0x40] sm:$0xff]
        %v299 = vld [vmem:[#allocation2 + $0x48] sm:$0xff]
        %v300 = vld [vmem:[#allocation2 + $0x50] sm:$0xff]
        %v301 = vld [vmem:[#allocation2 + $0x58] sm:$0xff]
        %v302 = vld [vmem:[#allocation2 + $0x60] sm:$0xff]
        %v303 = vld [vmem:[#allocation2 + $0x68] sm:$0xff]
        %v304 = vld [vmem:[#allocation2 + $0x70] sm:$0xff]
        %v305 = vld [vmem:[#allocation2 + $0x78] sm:$0xff]
        %v306 = vld [vmem:[#allocation2 + $0x80] sm:$0xff]
        %v307 = vld [vmem:[#allocation2 + $0x88] sm:$0xff]
        %v308 = vld [vmem:[#allocation2 + $0x90] sm:$0xff]
        %v309 = vld [vmem:[#allocation2 + $0x98] sm:$0xff]
        %v310 = vld [vmem:[#allocation2 + $0xa0] sm:$0xff]
        %v311 = vld [vmem:[#allocation2 + $0xa8] sm:$0xff]
        %v312 = vld [vmem:[#allocation2 + $0xb0] sm:$0xff]
        %v313 = vld [vmem:[#allocation2 + $0xb8] sm:$0xff]
        %v314 = vld [vmem:[#allocation2 + $0xc0] sm:$0xff]
        %v315 = vld [vmem:[#allocation2 + $0xc8] sm:$0xff]
        %v316 = vld [vmem:[#allocation2 + $0xd0] sm:$0xff]
        %v317 = vld [vmem:[#allocation2 + $0xd8] sm:$0xff]
        %v318 = vld [vmem:[#allocation2 + $0xe0] sm:$0xff]
        %v319 = vld [vmem:[#allocation2 + $0xe8] sm:$0xff]
        %v320 = vld [vmem:[#allocation2 + $0xf0] sm:$0xff]
        %v321 = vld [vmem:[#allocation2 + $0xf8] sm:$0xff]
        %v322 = vld [vmem:[#allocation2 + $0x100] sm:$0xff]
        %v323 = vld [vmem:[#allocation2 + $0x108] sm:$0xff]
        %v324 = vld [vmem:[#allocation2 + $0x110] sm:$0xff]
        %v325 = vld [vmem:[#allocation2 + $0x118] sm:$0xff]
        %v326 = vld [vmem:[#allocation2 + $0x120] sm:$0xff]
        %v327 = vld [vmem:[#allocation2 + $0x128] sm:$0xff]
        %v328 = vld [vmem:[#allocation2 + $0x130] sm:$0xff]
        %v329 = vld [vmem:[#allocation2 + $0x138] sm:$0xff]
        %v330 = vld [vmem:[#allocation2 + $0x140] sm:$0xff]
        %v331 = vld [vmem:[#allocation2 + $0x148] sm:$0xff]
        %v332 = vld [vmem:[#allocation2 + $0x150] sm:$0xff]
        %v333 = vld [vmem:[#allocation2 + $0x158] sm:$0xff]
        %v334 = vld [vmem:[#allocation2 + $0x160] sm:$0xff]
        %v335 = vld [vmem:[#allocation2 + $0x168] sm:$0xff]
        %v336 = vld [vmem:[#allocation2 + $0x170] sm:$0xff]
        %v337 = vld [vmem:[#allocation2 + $0x178] sm:$0xff]
        %v338 = vld [vmem:[#allocation2 + $0x180] sm:$0xff]
        %v339 = vld [vmem:[#allocation2 + $0x188] sm:$0xff]
        %v340 = vld [vmem:[#allocation2 + $0x190] sm:$0xff]
        %v341 = vld [vmem:[#allocation2 + $0x198] sm:$0xff]
        %v342 = vld [vmem:[#allocation2 + $0x1a0] sm:$0xff]
        %v343 = vld [vmem:[#allocation2 + $0x1a8] sm:$0xff]
        %v344 = vld [vmem:[#allocation2 + $0x1b0] sm:$0xff]
        %v345 = vld [vmem:[#allocation2 + $0x1b8] sm:$0xff]
        %v346 = vld [vmem:[#allocation2 + $0x1c0] sm:$0xff]
        %v347 = vld [vmem:[#allocation2 + $0x1c8] sm:$0xff]
        %v348 = vld [vmem:[#allocation2 + $0x1d0] sm:$0xff]
        %v349 = vld [vmem:[#allocation2 + $0x1d8] sm:$0xff]
        %v350 = vld [vmem:[#allocation2 + $0x1e0] sm:$0xff]
        %v351 = vld [vmem:[#allocation2 + $0x1e8] sm:$0xff]
        %v352 = vld [vmem:[#allocation2 + $0x1f0] sm:$0xff]
        %v353 = vld [vmem:[#allocation2 + $0x1f8] sm:$0xff]
        %v354 = vld [vmem:[#allocation3] sm:$0xff]
        %v355 = vld [vmem:[#allocation3 + $0x8] sm:$0xff]
        %v356 = vld [vmem:[#allocation3 + $0x10] sm:$0xff]
        %v357 = vld [vmem:[#allocation3 + $0x18] sm:$0xff]
        %v358 = vld [vmem:[#allocation3 + $0x20] sm:$0xff]
        %v359 = vld [vmem:[#allocation3 + $0x28] sm:$0xff]
        %v360 = vld [vmem:[#allocation3 + $0x30] sm:$0xff]
        %v361 = vld [vmem:[#allocation3 + $0x38] sm:$0xff]
        %v362 = vld [vmem:[#allocation3 + $0x40] sm:$0xff]
        %v363 = vld [vmem:[#allocation3 + $0x48] sm:$0xff]
        %v364 = vld [vmem:[#allocation3 + $0x50] sm:$0xff]
        %v365 = vld [vmem:[#allocation3 + $0x58] sm:$0xff]
        %v366 = vld [vmem:[#allocation3 + $0x60] sm:$0xff]
        %v367 = vld [vmem:[#allocation3 + $0x68] sm:$0xff]
        %v368 = vld [vmem:[#allocation3 + $0x70] sm:$0xff]
        %v369 = vld [vmem:[#allocation3 + $0x78] sm:$0xff]
        %v370 = vld [vmem:[#allocation3 + $0x80] sm:$0xff]
        %v371 = vld [vmem:[#allocation3 + $0x88] sm:$0xff]
        %v372 = vld [vmem:[#allocation3 + $0x90] sm:$0xff]
        %v373 = vld [vmem:[#allocation3 + $0x98] sm:$0xff]
        %v374 = vld [vmem:[#allocation3 + $0xa0] sm:$0xff]
        %v375 = vld [vmem:[#allocation3 + $0xa8] sm:$0xff]
        %v376 = vld [vmem:[#allocation3 + $0xb0] sm:$0xff]
        %v377 = vld [vmem:[#allocation3 + $0xb8] sm:$0xff]
        %v378 = vld [vmem:[#allocation3 + $0xc0] sm:$0xff]
        %v379 = vld [vmem:[#allocation3 + $0xc8] sm:$0xff]
        %v380 = vld [vmem:[#allocation3 + $0xd0] sm:$0xff]
        %v381 = vld [vmem:[#allocation3 + $0xd8] sm:$0xff]
        %v382 = vld [vmem:[#allocation3 + $0xe0] sm:$0xff]
        %v383 = vld [vmem:[#allocation3 + $0xe8] sm:$0xff]
        %v384 = vld [vmem:[#allocation3 + $0xf0] sm:$0xff]
        %v385 = vld [vmem:[#allocation3 + $0xf8] sm:$0xff]
        %v386 = vld [vmem:[#allocation3 + $0x100] sm:$0xff]
        %v387 = vld [vmem:[#allocation3 + $0x108] sm:$0xff]
        %v388 = vld [vmem:[#allocation3 + $0x110] sm:$0xff]
        %v389 = vld [vmem:[#allocation3 + $0x118] sm:$0xff]
        %v390 = vld [vmem:[#allocation3 + $0x120] sm:$0xff]
        %v391 = vld [vmem:[#allocation3 + $0x128] sm:$0xff]
        %v392 = vld [vmem:[#allocation3 + $0x130] sm:$0xff]
        %v393 = vld [vmem:[#allocation3 + $0x138] sm:$0xff]
        %v394 = vld [vmem:[#allocation3 + $0x140] sm:$0xff]
        %v395 = vld [vmem:[#allocation3 + $0x148] sm:$0xff]
        %v396 = vld [vmem:[#allocation3 + $0x150] sm:$0xff]
        %v397 = vld [vmem:[#allocation3 + $0x158] sm:$0xff]
        %v398 = vld [vmem:[#allocation3 + $0x160] sm:$0xff]
        %v399 = vld [vmem:[#allocation3 + $0x168] sm:$0xff]
        %v400 = vld [vmem:[#allocation3 + $0x170] sm:$0xff]
        %v401 = vld [vmem:[#allocation3 + $0x178] sm:$0xff]
        %v402 = vld [vmem:[#allocation3 + $0x180] sm:$0xff]
        %v403 = vld [vmem:[#allocation3 + $0x188] sm:$0xff]
        %v404 = vld [vmem:[#allocation3 + $0x190] sm:$0xff]
        %v405 = vld [vmem:[#allocation3 + $0x198] sm:$0xff]
        %v406 = vld [vmem:[#allocation3 + $0x1a0] sm:$0xff]
        %v407 = vld [vmem:[#allocation3 + $0x1a8] sm:$0xff]
        %v408 = vld [vmem:[#allocation3 + $0x1b0] sm:$0xff]
        %v409 = vld [vmem:[#allocation3 + $0x1b8] sm:$0xff]
        %v410 = vld [vmem:[#allocation3 + $0x1c0] sm:$0xff]
        %v411 = vld [vmem:[#allocation3 + $0x1c8] sm:$0xff]
        %v412 = vld [vmem:[#allocation3 + $0x1d0] sm:$0xff]
        %v413 = vld [vmem:[#allocation3 + $0x1d8] sm:$0xff]
        %v414 = vld [vmem:[#allocation3 + $0x1e0] sm:$0xff]
        %v415 = vld [vmem:[#allocation3 + $0x1e8] sm:$0xff]
        %v416 = vld [vmem:[#allocation3 + $0x1f0] sm:$0xff]
        %v417 = vld [vmem:[#allocation3 + $0x1f8] sm:$0xff]
        %v418 = vld [vmem:[#allocation3 + $0x200] sm:$0xff]
        %v419 = vld [vmem:[#allocation3 + $0x208] sm:$0xff]
        %v420 = vld [vmem:[#allocation3 + $0x210] sm:$0xff]
        %v421 = vld [vmem:[#allocation3 + $0x218] sm:$0xff]
        %v422 = vld [vmem:[#allocation3 + $0x220] sm:$0xff]
        %v423 = vld [vmem:[#allocation3 + $0x228] sm:$0xff]
        %v424 = vld [vmem:[#allocation3 + $0x230] sm:$0xff]
        %v425 = vld [vmem:[#allocation3 + $0x238] sm:$0xff]
        %v426 = vld [vmem:[#allocation3 + $0x240] sm:$0xff]
        %v427 = vld [vmem:[#allocation3 + $0x248] sm:$0xff]
        %v428 = vld [vmem:[#allocation3 + $0x250] sm:$0xff]
        %v429 = vld [vmem:[#allocation3 + $0x258] sm:$0xff]
        %v430 = vld [vmem:[#allocation3 + $0x260] sm:$0xff]
        %v431 = vld [vmem:[#allocation3 + $0x268] sm:$0xff]
        %v432 = vld [vmem:[#allocation3 + $0x270] sm:$0xff]
        %v433 = vld [vmem:[#allocation3 + $0x278] sm:$0xff]
        %v434 = vld [vmem:[#allocation3 + $0x280] sm:$0xff]
        %v435 = vld [vmem:[#allocation3 + $0x288] sm:$0xff]
        %v436 = vld [vmem:[#allocation3 + $0x290] sm:$0xff]
        %v437 = vld [vmem:[#allocation3 + $0x298] sm:$0xff]
        %v438 = vld [vmem:[#allocation3 + $0x2a0] sm:$0xff]
        %v439 = vld [vmem:[#allocation3 + $0x2a8] sm:$0xff]
        %v440 = vld [vmem:[#allocation3 + $0x2b0] sm:$0xff]
        %v441 = vld [vmem:[#allocation3 + $0x2b8] sm:$0xff]
        %v442 = vld [vmem:[#allocation3 + $0x2c0] sm:$0xff]
        %v443 = vld [vmem:[#allocation3 + $0x2c8] sm:$0xff]
        %v444 = vld [vmem:[#allocation3 + $0x2d0] sm:$0xff]
        %v445 = vld [vmem:[#allocation3 + $0x2d8] sm:$0xff]
        %v446 = vld [vmem:[#allocation3 + $0x2e0] sm:$0xff]
        %v447 = vld [vmem:[#allocation3 + $0x2e8] sm:$0xff]
        %v448 = vld [vmem:[#allocation3 + $0x2f0] sm:$0xff]
        %v449 = vld [vmem:[#allocation3 + $0x2f8] sm:$0xff]
        %v450 = vld [vmem:[#allocation3 + $0x300] sm:$0xff]
        %v451 = vld [vmem:[#allocation3 + $0x308] sm:$0xff]
        %v452 = vld [vmem:[#allocation3 + $0x310] sm:$0xff]
        %v453 = vld [vmem:[#allocation3 + $0x318] sm:$0xff]
        %v454 = vld [vmem:[#allocation3 + $0x320] sm:$0xff]
        %v455 = vld [vmem:[#allocation3 + $0x328] sm:$0xff]
        %v456 = vld [vmem:[#allocation3 + $0x330] sm:$0xff]
        %v457 = vld [vmem:[#allocation3 + $0x338] sm:$0xff]
        %v458 = vld [vmem:[#allocation3 + $0x340] sm:$0xff]
        %v459 = vld [vmem:[#allocation3 + $0x348] sm:$0xff]
        %v460 = vld [vmem:[#allocation3 + $0x350] sm:$0xff]
        %v461 = vld [vmem:[#allocation3 + $0x358] sm:$0xff]
        %v462 = vld [vmem:[#allocation3 + $0x360] sm:$0xff]
        %v463 = vld [vmem:[#allocation3 + $0x368] sm:$0xff]
        %v464 = vld [vmem:[#allocation3 + $0x370] sm:$0xff]
        %v465 = vld [vmem:[#allocation3 + $0x378] sm:$0xff]
        %v466 = vld [vmem:[#allocation3 + $0x380] sm:$0xff]
        %v467 = vld [vmem:[#allocation3 + $0x388] sm:$0xff]
        %v468 = vld [vmem:[#allocation3 + $0x390] sm:$0xff]
        %v469 = vld [vmem:[#allocation3 + $0x398] sm:$0xff]
        %v470 = vld [vmem:[#allocation3 + $0x3a0] sm:$0xff]
        %v471 = vld [vmem:[#allocation3 + $0x3a8] sm:$0xff]
        %v472 = vld [vmem:[#allocation3 + $0x3b0] sm:$0xff]
        %v473 = vld [vmem:[#allocation3 + $0x3b8] sm:$0xff]
        %v474 = vld [vmem:[#allocation3 + $0x3c0] sm:$0xff]
        %v475 = vld [vmem:[#allocation3 + $0x3c8] sm:$0xff]
        %v476 = vld [vmem:[#allocation3 + $0x3d0] sm:$0xff]
        %v477 = vld [vmem:[#allocation3 + $0x3d8] sm:$0xff]
        %v478 = vld [vmem:[#allocation3 + $0x3e0] sm:$0xff]
        %v479 = vld [vmem:[#allocation3 + $0x3e8] sm:$0xff]
        %v480 = vld [vmem:[#allocation3 + $0x3f0] sm:$0xff]
        %v481 = vld [vmem:[#allocation3 + $0x3f8] sm:$0xff]
        %v482 = vpack.c.bf16 %v358, %v354
        %v483 = vpack.c.bf16 %v359, %v355
        %v484 = vpack.c.bf16 %v360, %v356
        %v485 = vpack.c.bf16 %v361, %v357
        %v486 = vpack.c.bf16 %v366, %v362
        %v487 = vpack.c.bf16 %v367, %v363
        %v488 = vpack.c.bf16 %v368, %v364
        %v489 = vpack.c.bf16 %v369, %v365
        %v490 = vpack.c.bf16 %v374, %v370
        %v491 = vpack.c.bf16 %v375, %v371
        %v492 = vpack.c.bf16 %v376, %v372
        %v493 = vpack.c.bf16 %v377, %v373
        %v494 = vpack.c.bf16 %v382, %v378
        %v495 = vpack.c.bf16 %v383, %v379
        %v496 = vpack.c.bf16 %v384, %v380
        %v497 = vpack.c.bf16 %v385, %v381
        %v498 = vpack.c.bf16 %v390, %v386
        %v499 = vpack.c.bf16 %v391, %v387
        %v500 = vpack.c.bf16 %v392, %v388
        %v501 = vpack.c.bf16 %v393, %v389
        %v502 = vpack.c.bf16 %v398, %v394
        %v503 = vpack.c.bf16 %v399, %v395
        %v504 = vpack.c.bf16 %v400, %v396
        %v505 = vpack.c.bf16 %v401, %v397
        %v506 = vpack.c.bf16 %v406, %v402
        %v507 = vpack.c.bf16 %v407, %v403
        %v508 = vpack.c.bf16 %v408, %v404
        %v509 = vpack.c.bf16 %v409, %v405
        %v510 = vpack.c.bf16 %v414, %v410
        %v511 = vpack.c.bf16 %v415, %v411
        %v512 = vpack.c.bf16 %v416, %v412
        %v513 = vpack.c.bf16 %v417, %v413
        %v514 = vpack.c.bf16 %v422, %v418
        %v515 = vpack.c.bf16 %v423, %v419
        %v516 = vpack.c.bf16 %v424, %v420
        %v517 = vpack.c.bf16 %v425, %v421
        %v518 = vpack.c.bf16 %v430, %v426
        %v519 = vpack.c.bf16 %v431, %v427
        %v520 = vpack.c.bf16 %v432, %v428
        %v521 = vpack.c.bf16 %v433, %v429
        %v522 = vpack.c.bf16 %v438, %v434
        %v523 = vpack.c.bf16 %v439, %v435
        %v524 = vpack.c.bf16 %v440, %v436
        %v525 = vpack.c.bf16 %v441, %v437
        %v526 = vpack.c.bf16 %v446, %v442
        %v527 = vpack.c.bf16 %v447, %v443
        %v528 = vpack.c.bf16 %v448, %v444
        %v529 = vpack.c.bf16 %v449, %v445
        %v530 = vpack.c.bf16 %v454, %v450
        %v531 = vpack.c.bf16 %v455, %v451
        %v532 = vpack.c.bf16 %v456, %v452
        %v533 = vpack.c.bf16 %v457, %v453
        %v534 = vpack.c.bf16 %v462, %v458
        %v535 = vpack.c.bf16 %v463, %v459
        %v536 = vpack.c.bf16 %v464, %v460
        %v537 = vpack.c.bf16 %v465, %v461
        %v538 = vpack.c.bf16 %v470, %v466
        %v539 = vpack.c.bf16 %v471, %v467
        %v540 = vpack.c.bf16 %v472, %v468
        %v541 = vpack.c.bf16 %v473, %v469
        %v542 = vpack.c.bf16 %v478, %v474
        %v543 = vpack.c.bf16 %v479, %v475
        %v544 = vpack.c.bf16 %v480, %v476
        %v545 = vpack.c.bf16 %v481, %v477
        %v546 = vld [vmem:[%s195] sm:$0xff]
        %v547 = vld [vmem:[%s195 + $0x8] sm:$0xff]
        %v548 = vld [vmem:[%s195 + $0x10] sm:$0xff]
        %v549 = vld [vmem:[%s195 + $0x18] sm:$0xff]
        %v550 = vld [vmem:[%s195 + $0x20] sm:$0xff]
        %v551 = vld [vmem:[%s195 + $0x28] sm:$0xff]
        %v552 = vld [vmem:[%s195 + $0x30] sm:$0xff]
        %v553 = vld [vmem:[%s195 + $0x38] sm:$0xff]
        %v554 = vld [vmem:[%s195 + $0x40] sm:$0xff]
        %v555 = vld [vmem:[%s195 + $0x48] sm:$0xff]
        %v556 = vld [vmem:[%s195 + $0x50] sm:$0xff]
        %v557 = vld [vmem:[%s195 + $0x58] sm:$0xff]
        %v558 = vld [vmem:[%s195 + $0x60] sm:$0xff]
        %v559 = vld [vmem:[%s195 + $0x68] sm:$0xff]
        %v560 = vld [vmem:[%s195 + $0x70] sm:$0xff]
        %v561 = vld [vmem:[%s195 + $0x78] sm:$0xff]
        %v562 = vld [vmem:[%s195 + $0x80] sm:$0xff]
        %v563 = vld [vmem:[%s195 + $0x88] sm:$0xff]
        %v564 = vld [vmem:[%s195 + $0x90] sm:$0xff]
        %v565 = vld [vmem:[%s195 + $0x98] sm:$0xff]
        %v566 = vld [vmem:[%s195 + $0xa0] sm:$0xff]
        %v567 = vld [vmem:[%s195 + $0xa8] sm:$0xff]
        %v568 = vld [vmem:[%s195 + $0xb0] sm:$0xff]
        %v569 = vld [vmem:[%s195 + $0xb8] sm:$0xff]
        %v570 = vld [vmem:[%s195 + $0xc0] sm:$0xff]
        %v571 = vld [vmem:[%s195 + $0xc8] sm:$0xff]
        %v572 = vld [vmem:[%s195 + $0xd0] sm:$0xff]
        %v573 = vld [vmem:[%s195 + $0xd8] sm:$0xff]
        %v574 = vld [vmem:[%s195 + $0xe0] sm:$0xff]
        %v575 = vld [vmem:[%s195 + $0xe8] sm:$0xff]
        %v576 = vld [vmem:[%s195 + $0xf0] sm:$0xff]
        %v577 = vld [vmem:[%s195 + $0xf8] sm:$0xff]
        %v578 = vld [vmem:[%s195 + $0x100] sm:$0xff]
        %v579 = vld [vmem:[%s195 + $0x108] sm:$0xff]
        %v580 = vld [vmem:[%s195 + $0x110] sm:$0xff]
        %v581 = vld [vmem:[%s195 + $0x118] sm:$0xff]
        %v582 = vld [vmem:[%s195 + $0x120] sm:$0xff]
        %v583 = vld [vmem:[%s195 + $0x128] sm:$0xff]
        %v584 = vld [vmem:[%s195 + $0x130] sm:$0xff]
        %v585 = vld [vmem:[%s195 + $0x138] sm:$0xff]
        %v586 = vld [vmem:[%s195 + $0x140] sm:$0xff]
        %v587 = vld [vmem:[%s195 + $0x148] sm:$0xff]
        %v588 = vld [vmem:[%s195 + $0x150] sm:$0xff]
        %v589 = vld [vmem:[%s195 + $0x158] sm:$0xff]
        %v590 = vld [vmem:[%s195 + $0x160] sm:$0xff]
        %v591 = vld [vmem:[%s195 + $0x168] sm:$0xff]
        %v592 = vld [vmem:[%s195 + $0x170] sm:$0xff]
        %v593 = vld [vmem:[%s195 + $0x178] sm:$0xff]
        %v594 = vld [vmem:[%s195 + $0x180] sm:$0xff]
        %v595 = vld [vmem:[%s195 + $0x188] sm:$0xff]
        %v596 = vld [vmem:[%s195 + $0x190] sm:$0xff]
        %v597 = vld [vmem:[%s195 + $0x198] sm:$0xff]
        %v598 = vld [vmem:[%s195 + $0x1a0] sm:$0xff]
        %v599 = vld [vmem:[%s195 + $0x1a8] sm:$0xff]
        %v600 = vld [vmem:[%s195 + $0x1b0] sm:$0xff]
        %v601 = vld [vmem:[%s195 + $0x1b8] sm:$0xff]
        %v602 = vld [vmem:[%s195 + $0x1c0] sm:$0xff]
        %v603 = vld [vmem:[%s195 + $0x1c8] sm:$0xff]
        %v604 = vld [vmem:[%s195 + $0x1d0] sm:$0xff]
        %v605 = vld [vmem:[%s195 + $0x1d8] sm:$0xff]
        %v606 = vld [vmem:[%s195 + $0x1e0] sm:$0xff]
        %v607 = vld [vmem:[%s195 + $0x1e8] sm:$0xff]
        %v608 = vld [vmem:[%s195 + $0x1f0] sm:$0xff]
        %v609 = vld [vmem:[%s195 + $0x1f8] sm:$0xff]
        %v610 = vld [vmem:[%s195 + $0x200] sm:$0xff]
        %v611 = vld [vmem:[%s195 + $0x208] sm:$0xff]
        %v612 = vld [vmem:[%s195 + $0x210] sm:$0xff]
        %v613 = vld [vmem:[%s195 + $0x218] sm:$0xff]
        %v614 = vld [vmem:[%s195 + $0x220] sm:$0xff]
        %v615 = vld [vmem:[%s195 + $0x228] sm:$0xff]
        %v616 = vld [vmem:[%s195 + $0x230] sm:$0xff]
        %v617 = vld [vmem:[%s195 + $0x238] sm:$0xff]
        %v618 = vld [vmem:[%s195 + $0x240] sm:$0xff]
        %v619 = vld [vmem:[%s195 + $0x248] sm:$0xff]
        %v620 = vld [vmem:[%s195 + $0x250] sm:$0xff]
        %v621 = vld [vmem:[%s195 + $0x258] sm:$0xff]
        %v622 = vld [vmem:[%s195 + $0x260] sm:$0xff]
        %v623 = vld [vmem:[%s195 + $0x268] sm:$0xff]
        %v624 = vld [vmem:[%s195 + $0x270] sm:$0xff]
        %v625 = vld [vmem:[%s195 + $0x278] sm:$0xff]
        %v626 = vld [vmem:[%s195 + $0x280] sm:$0xff]
        %v627 = vld [vmem:[%s195 + $0x288] sm:$0xff]
        %v628 = vld [vmem:[%s195 + $0x290] sm:$0xff]
        %v629 = vld [vmem:[%s195 + $0x298] sm:$0xff]
        %v630 = vld [vmem:[%s195 + $0x2a0] sm:$0xff]
        %v631 = vld [vmem:[%s195 + $0x2a8] sm:$0xff]
        %v632 = vld [vmem:[%s195 + $0x2b0] sm:$0xff]
        %v633 = vld [vmem:[%s195 + $0x2b8] sm:$0xff]
        %v634 = vld [vmem:[%s195 + $0x2c0] sm:$0xff]
        %v635 = vld [vmem:[%s195 + $0x2c8] sm:$0xff]
        %v636 = vld [vmem:[%s195 + $0x2d0] sm:$0xff]
        %v637 = vld [vmem:[%s195 + $0x2d8] sm:$0xff]
        %v638 = vld [vmem:[%s195 + $0x2e0] sm:$0xff]
        %v639 = vld [vmem:[%s195 + $0x2e8] sm:$0xff]
        %v640 = vld [vmem:[%s195 + $0x2f0] sm:$0xff]
        %v641 = vld [vmem:[%s195 + $0x2f8] sm:$0xff]
        %v642 = vld [vmem:[%s195 + $0x300] sm:$0xff]
        %v643 = vld [vmem:[%s195 + $0x308] sm:$0xff]
        %v644 = vld [vmem:[%s195 + $0x310] sm:$0xff]
        %v645 = vld [vmem:[%s195 + $0x318] sm:$0xff]
        %v646 = vld [vmem:[%s195 + $0x320] sm:$0xff]
        %v647 = vld [vmem:[%s195 + $0x328] sm:$0xff]
        %v648 = vld [vmem:[%s195 + $0x330] sm:$0xff]
        %v649 = vld [vmem:[%s195 + $0x338] sm:$0xff]
        %v650 = vld [vmem:[%s195 + $0x340] sm:$0xff]
        %v651 = vld [vmem:[%s195 + $0x348] sm:$0xff]
        %v652 = vld [vmem:[%s195 + $0x350] sm:$0xff]
        %v653 = vld [vmem:[%s195 + $0x358] sm:$0xff]
        %v654 = vld [vmem:[%s195 + $0x360] sm:$0xff]
        %v655 = vld [vmem:[%s195 + $0x368] sm:$0xff]
        %v656 = vld [vmem:[%s195 + $0x370] sm:$0xff]
        %v657 = vld [vmem:[%s195 + $0x378] sm:$0xff]
        %v658 = vld [vmem:[%s195 + $0x380] sm:$0xff]
        %v659 = vld [vmem:[%s195 + $0x388] sm:$0xff]
        %v660 = vld [vmem:[%s195 + $0x390] sm:$0xff]
        %v661 = vld [vmem:[%s195 + $0x398] sm:$0xff]
        %v662 = vld [vmem:[%s195 + $0x3a0] sm:$0xff]
        %v663 = vld [vmem:[%s195 + $0x3a8] sm:$0xff]
        %v664 = vld [vmem:[%s195 + $0x3b0] sm:$0xff]
        %v665 = vld [vmem:[%s195 + $0x3b8] sm:$0xff]
        %v666 = vld [vmem:[%s195 + $0x3c0] sm:$0xff]
        %v667 = vld [vmem:[%s195 + $0x3c8] sm:$0xff]
        %v668 = vld [vmem:[%s195 + $0x3d0] sm:$0xff]
        %v669 = vld [vmem:[%s195 + $0x3d8] sm:$0xff]
        %v670 = vld [vmem:[%s195 + $0x3e0] sm:$0xff]
        %v671 = vld [vmem:[%s195 + $0x3e8] sm:$0xff]
        %v672 = vld [vmem:[%s195 + $0x3f0] sm:$0xff]
        %v673 = vld [vmem:[%s195 + $0x3f8] sm:$0xff]
        %v674 = vpack.c.bf16 %v548, %v546
        %v675 = vpack.c.bf16 %v549, %v547
        %v676 = vpack.c.bf16 %v552, %v550
        %v677 = vpack.c.bf16 %v553, %v551
        %v678 = vpack.c.bf16 %v556, %v554
        %v679 = vpack.c.bf16 %v557, %v555
        %v680 = vpack.c.bf16 %v560, %v558
        %v681 = vpack.c.bf16 %v561, %v559
        %v682 = vpack.c.bf16 %v564, %v562
        %v683 = vpack.c.bf16 %v565, %v563
        %v684 = vpack.c.bf16 %v568, %v566
        %v685 = vpack.c.bf16 %v569, %v567
        %v686 = vpack.c.bf16 %v572, %v570
        %v687 = vpack.c.bf16 %v573, %v571
        %v688 = vpack.c.bf16 %v576, %v574
        %v689 = vpack.c.bf16 %v577, %v575
        %v690 = vpack.c.bf16 %v580, %v578
        %v691 = vpack.c.bf16 %v581, %v579
        %v692 = vpack.c.bf16 %v584, %v582
        %v693 = vpack.c.bf16 %v585, %v583
        %v694 = vpack.c.bf16 %v588, %v586
        %v695 = vpack.c.bf16 %v589, %v587
        %v696 = vpack.c.bf16 %v592, %v590
        %v697 = vpack.c.bf16 %v593, %v591
        %v698 = vpack.c.bf16 %v596, %v594
        %v699 = vpack.c.bf16 %v597, %v595
        %v700 = vpack.c.bf16 %v600, %v598
        %v701 = vpack.c.bf16 %v601, %v599
        %v702 = vpack.c.bf16 %v604, %v602
        %v703 = vpack.c.bf16 %v605, %v603
        %v704 = vpack.c.bf16 %v608, %v606
        %v705 = vpack.c.bf16 %v609, %v607
        %v706 = vpack.c.bf16 %v612, %v610
        %v707 = vpack.c.bf16 %v613, %v611
        %v708 = vpack.c.bf16 %v616, %v614
        %v709 = vpack.c.bf16 %v617, %v615
        %v710 = vpack.c.bf16 %v620, %v618
        %v711 = vpack.c.bf16 %v621, %v619
        %v712 = vpack.c.bf16 %v624, %v622
        %v713 = vpack.c.bf16 %v625, %v623
        %v714 = vpack.c.bf16 %v628, %v626
        %v715 = vpack.c.bf16 %v629, %v627
        %v716 = vpack.c.bf16 %v632, %v630
        %v717 = vpack.c.bf16 %v633, %v631
        %v718 = vpack.c.bf16 %v636, %v634
        %v719 = vpack.c.bf16 %v637, %v635
        %v720 = vpack.c.bf16 %v640, %v638
        %v721 = vpack.c.bf16 %v641, %v639
        %v722 = vpack.c.bf16 %v644, %v642
        %v723 = vpack.c.bf16 %v645, %v643
        %v724 = vpack.c.bf16 %v648, %v646
        %v725 = vpack.c.bf16 %v649, %v647
        %v726 = vpack.c.bf16 %v652, %v650
        %v727 = vpack.c.bf16 %v653, %v651
        %v728 = vpack.c.bf16 %v656, %v654
        %v729 = vpack.c.bf16 %v657, %v655
        %v730 = vpack.c.bf16 %v660, %v658
        %v731 = vpack.c.bf16 %v661, %v659
        %v732 = vpack.c.bf16 %v664, %v662
        %v733 = vpack.c.bf16 %v665, %v663
        %v734 = vpack.c.bf16 %v668, %v666
        %v735 = vpack.c.bf16 %v669, %v667
        %v736 = vpack.c.bf16 %v672, %v670
        %v737 = vpack.c.bf16 %v673, %v671
        %738 = vmatprep.subr.bf16.mxu0 %v675
        %739 = vmatpush1.bf16.msra.mxu0 %v674
        %740 = vmatprep.subr.bf16.mxu0 %v677
        %741 = vmatpush1.bf16.msra.mxu0 %v676
        %742 = vmatprep.subr.bf16.mxu0 %v679
        %743 = vmatpush1.bf16.msra.mxu0 %v678
        %744 = vmatprep.subr.bf16.mxu0 %v681
        %745 = vmatpush1.bf16.msra.mxu0 %v680
        %746 = vmatprep.subr.bf16.mxu0 %v683
        %747 = vmatpush1.bf16.msra.mxu0 %v682
        %748 = vmatprep.subr.bf16.mxu0 %v685
        %749 = vmatpush1.bf16.msra.mxu0 %v684
        %750 = vmatprep.subr.bf16.mxu0 %v687
        %751 = vmatpush1.bf16.msra.mxu0 %v686
        %752 = vmatprep.subr.bf16.mxu0 %v689
        %753 = vmatpush1.bf16.msra.mxu0 %v688
        %754 = vmatprep.subr.bf16.mxu0 %v691
        %755 = vmatpush1.bf16.msra.mxu0 %v690
        %756 = vmatprep.subr.bf16.mxu0 %v693
        %757 = vmatpush1.bf16.msra.mxu0 %v692
        %758 = vmatprep.subr.bf16.mxu0 %v695
        %759 = vmatpush1.bf16.msra.mxu0 %v694
        %760 = vmatprep.subr.bf16.mxu0 %v697
        %761 = vmatpush1.bf16.msra.mxu0 %v696
        %762 = vmatprep.subr.bf16.mxu0 %v699
        %763 = vmatpush1.bf16.msra.mxu0 %v698
        %764 = vmatprep.subr.bf16.mxu0 %v701
        %765 = vmatpush1.bf16.msra.mxu0 %v700
        %766 = vmatprep.subr.bf16.mxu0 %v703
        %767 = vmatpush1.bf16.msra.mxu0 %v702
        %768 = vmatprep.subr.bf16.mxu0 %v705
        %769 = vmatpush1.bf16.msra.mxu0 %v704
        %770 = vmatprep.mubr.bf16.mxu0 %v483
        %771 = vmatmul.mubr.bf16.gmra.mrb[0].mxu0 %v482
        %v772 = vpop.f32.mrb[0].mxu0
        %v773 = vadd.f32 0.0, %v772
        %v774 = vpop.f32.mrb[0].mxu0
        %v775 = vadd.f32 0.0, %v774
        %v776 = vpop.f32.mrb[0].mxu0
        %v777 = vadd.f32 0.0, %v776
        %v778 = vpop.f32.mrb[0].mxu0
        %v779 = vadd.f32 0.0, %v778
        %780 = vmatprep.mubr.bf16.mxu0 %v487
        %781 = vmatmul.mubr.bf16.gmra.mrb[0].mxu0 %v486
        %v782 = vpop.f32.mrb[0].mxu0
        %v783 = vadd.f32 0.0, %v782
        %v784 = vpop.f32.mrb[0].mxu0
        %v785 = vadd.f32 0.0, %v784
        %v786 = vpop.f32.mrb[0].mxu0
        %v787 = vadd.f32 0.0, %v786
        %v788 = vpop.f32.mrb[0].mxu0
        %v789 = vadd.f32 0.0, %v788
        %790 = vmatprep.mubr.bf16.mxu0 %v491
        %791 = vmatmul.mubr.bf16.gmra.mrb[0].mxu0 %v490
        %v792 = vpop.f32.mrb[0].mxu0
        %v793 = vadd.f32 0.0, %v792
        %v794 = vpop.f32.mrb[0].mxu0
        %v795 = vadd.f32 0.0, %v794
        %v796 = vpop.f32.mrb[0].mxu0
        %v797 = vadd.f32 0.0, %v796
        %v798 = vpop.f32.mrb[0].mxu0
        %v799 = vadd.f32 0.0, %v798
        %800 = vmatprep.mubr.bf16.mxu0 %v495
        %801 = vmatmul.mubr.bf16.gmra.mrb[0].mxu0 %v494
        %v802 = vpop.f32.mrb[0].mxu0
        %v803 = vadd.f32 0.0, %v802
        %v804 = vpop.f32.mrb[0].mxu0
        %v805 = vadd.f32 0.0, %v804
        %v806 = vpop.f32.mrb[0].mxu0
        %v807 = vadd.f32 0.0, %v806
        %v808 = vpop.f32.mrb[0].mxu0
        %v809 = vadd.f32 0.0, %v808
        %810 = vmatprep.mubr.bf16.mxu0 %v499
        %811 = vmatmul.mubr.bf16.gmra.mrb[0].mxu0 %v498
        %v812 = vpop.f32.mrb[0].mxu0
        %v813 = vadd.f32 0.0, %v812
        %v814 = vpop.f32.mrb[0].mxu0
        %v815 = vadd.f32 0.0, %v814
        %v816 = vpop.f32.mrb[0].mxu0
        %v817 = vadd.f32 0.0, %v816
        %v818 = vpop.f32.mrb[0].mxu0
        %v819 = vadd.f32 0.0, %v818
        %820 = vmatprep.mubr.bf16.mxu0 %v503
        %821 = vmatmul.mubr.bf16.gmra.mrb[0].mxu0 %v502
        %v822 = vpop.f32.mrb[0].mxu0
        %v823 = vadd.f32 0.0, %v822
        %v824 = vpop.f32.mrb[0].mxu0
        %v825 = vadd.f32 0.0, %v824
        %v826 = vpop.f32.mrb[0].mxu0
        %v827 = vadd.f32 0.0, %v826
        %v828 = vpop.f32.mrb[0].mxu0
        %v829 = vadd.f32 0.0, %v828
        %830 = vmatprep.mubr.bf16.mxu0 %v507
        %831 = vmatmul.mubr.bf16.gmra.mrb[0].mxu0 %v506
        %v832 = vpop.f32.mrb[0].mxu0
        %v833 = vadd.f32 0.0, %v832
        %v834 = vpop.f32.mrb[0].mxu0
        %v835 = vadd.f32 0.0, %v834
        %v836 = vpop.f32.mrb[0].mxu0
        %v837 = vadd.f32 0.0, %v836
        %v838 = vpop.f32.mrb[0].mxu0
        %v839 = vadd.f32 0.0, %v838
        %840 = vmatprep.mubr.bf16.mxu0 %v511
        %841 = vmatmul.mubr.bf16.gmra.mrb[0].mxu0 %v510
        %v842 = vpop.f32.mrb[0].mxu0
        %v843 = vadd.f32 0.0, %v842
        %v844 = vpop.f32.mrb[0].mxu0
        %v845 = vadd.f32 0.0, %v844
        %v846 = vpop.f32.mrb[0].mxu0
        %v847 = vadd.f32 0.0, %v846
        %v848 = vpop.f32.mrb[0].mxu0
        %v849 = vadd.f32 0.0, %v848
        %850 = vmatprep.mubr.bf16.mxu0 %v515
        %851 = vmatmul.mubr.bf16.gmra.mrb[0].mxu0 %v514
        %v852 = vpop.f32.mrb[0].mxu0
        %v853 = vadd.f32 0.0, %v852
        %v854 = vpop.f32.mrb[0].mxu0
        %v855 = vadd.f32 0.0, %v854
        %v856 = vpop.f32.mrb[0].mxu0
        %v857 = vadd.f32 0.0, %v856
        %v858 = vpop.f32.mrb[0].mxu0
        %v859 = vadd.f32 0.0, %v858
        %860 = vmatprep.mubr.bf16.mxu0 %v519
        %861 = vmatmul.mubr.bf16.gmra.mrb[0].mxu0 %v518
        %v862 = vpop.f32.mrb[0].mxu0
        %v863 = vadd.f32 0.0, %v862
        %v864 = vpop.f32.mrb[0].mxu0
        %v865 = vadd.f32 0.0, %v864
        %v866 = vpop.f32.mrb[0].mxu0
        %v867 = vadd.f32 0.0, %v866
        %v868 = vpop.f32.mrb[0].mxu0
        %v869 = vadd.f32 0.0, %v868
        %870 = vmatprep.mubr.bf16.mxu0 %v523
        %871 = vmatmul.mubr.bf16.gmra.mrb[0].mxu0 %v522
        %v872 = vpop.f32.mrb[0].mxu0
        %v873 = vadd.f32 0.0, %v872
        %v874 = vpop.f32.mrb[0].mxu0
        %v875 = vadd.f32 0.0, %v874
        %v876 = vpop.f32.mrb[0].mxu0
        %v877 = vadd.f32 0.0, %v876
        %v878 = vpop.f32.mrb[0].mxu0
        %v879 = vadd.f32 0.0, %v878
        %880 = vmatprep.mubr.bf16.mxu0 %v527
        %881 = vmatmul.mubr.bf16.gmra.mrb[0].mxu0 %v526
        %v882 = vpop.f32.mrb[0].mxu0
        %v883 = vadd.f32 0.0, %v882
        %v884 = vpop.f32.mrb[0].mxu0
        %v885 = vadd.f32 0.0, %v884
        %v886 = vpop.f32.mrb[0].mxu0
        %v887 = vadd.f32 0.0, %v886
        %v888 = vpop.f32.mrb[0].mxu0
        %v889 = vadd.f32 0.0, %v888
        %890 = vmatprep.mubr.bf16.mxu0 %v531
        %891 = vmatmul.mubr.bf16.gmra.mrb[0].mxu0 %v530
        %v892 = vpop.f32.mrb[0].mxu0
        %v893 = vadd.f32 0.0, %v892
        %v894 = vpop.f32.mrb[0].mxu0
        %v895 = vadd.f32 0.0, %v894
        %v896 = vpop.f32.mrb[0].mxu0
        %v897 = vadd.f32 0.0, %v896
        %v898 = vpop.f32.mrb[0].mxu0
        %v899 = vadd.f32 0.0, %v898
        %900 = vmatprep.mubr.bf16.mxu0 %v535
        %901 = vmatmul.mubr.bf16.gmra.mrb[0].mxu0 %v534
        %v902 = vpop.f32.mrb[0].mxu0
        %v903 = vadd.f32 0.0, %v902
        %v904 = vpop.f32.mrb[0].mxu0
        %v905 = vadd.f32 0.0, %v904
        %v906 = vpop.f32.mrb[0].mxu0
        %v907 = vadd.f32 0.0, %v906
        %v908 = vpop.f32.mrb[0].mxu0
        %v909 = vadd.f32 0.0, %v908
        %910 = vmatprep.mubr.bf16.mxu0 %v539
        %911 = vmatmul.mubr.bf16.gmra.mrb[0].mxu0 %v538
        %v912 = vpop.f32.mrb[0].mxu0
        %v913 = vadd.f32 0.0, %v912
        %v914 = vpop.f32.mrb[0].mxu0
        %v915 = vadd.f32 0.0, %v914
        %v916 = vpop.f32.mrb[0].mxu0
        %v917 = vadd.f32 0.0, %v916
        %v918 = vpop.f32.mrb[0].mxu0
        %v919 = vadd.f32 0.0, %v918
        %920 = vmatprep.mubr.bf16.mxu0 %v543
        %921 = vmatmul.mubr.bf16.gmra.mrb[0].mxu0 %v542
        %v922 = vpop.f32.mrb[0].mxu0
        %v923 = vadd.f32 0.0, %v922
        %v924 = vpop.f32.mrb[0].mxu0
        %v925 = vadd.f32 0.0, %v924
        %v926 = vpop.f32.mrb[0].mxu0
        %v927 = vadd.f32 0.0, %v926
        %v928 = vpop.f32.mrb[0].mxu0
        %v929 = vadd.f32 0.0, %v928
        %930 = vdwg.mxu0
        %931 = vmatprep.subr.bf16.mxu0 %v707
        %932 = vmatpush1.bf16.msra.mxu0 %v706
        %933 = vmatprep.subr.bf16.mxu0 %v709
        %934 = vmatpush1.bf16.msra.mxu0 %v708
        %935 = vmatprep.subr.bf16.mxu0 %v711
        %936 = vmatpush1.bf16.msra.mxu0 %v710
        %937 = vmatprep.subr.bf16.mxu0 %v713
        %938 = vmatpush1.bf16.msra.mxu0 %v712
        %939 = vmatprep.subr.bf16.mxu0 %v715
        %940 = vmatpush1.bf16.msra.mxu0 %v714
        %941 = vmatprep.subr.bf16.mxu0 %v717
        %942 = vmatpush1.bf16.msra.mxu0 %v716
        %943 = vmatprep.subr.bf16.mxu0 %v719
        %944 = vmatpush1.bf16.msra.mxu0 %v718
        %945 = vmatprep.subr.bf16.mxu0 %v721
        %946 = vmatpush1.bf16.msra.mxu0 %v720
        %947 = vmatprep.subr.bf16.mxu0 %v723
        %948 = vmatpush1.bf16.msra.mxu0 %v722
        %949 = vmatprep.subr.bf16.mxu0 %v725
        %950 = vmatpush1.bf16.msra.mxu0 %v724
        %951 = vmatprep.subr.bf16.mxu0 %v727
        %952 = vmatpush1.bf16.msra.mxu0 %v726
        %953 = vmatprep.subr.bf16.mxu0 %v729
        %954 = vmatpush1.bf16.msra.mxu0 %v728
        %955 = vmatprep.subr.bf16.mxu0 %v731
        %956 = vmatpush1.bf16.msra.mxu0 %v730
        %957 = vmatprep.subr.bf16.mxu0 %v733
        %958 = vmatpush1.bf16.msra.mxu0 %v732
        %959 = vmatprep.subr.bf16.mxu0 %v735
        %960 = vmatpush1.bf16.msra.mxu0 %v734
        %961 = vmatprep.subr.bf16.mxu0 %v737
        %962 = vmatpush1.bf16.msra.mxu0 %v736
        %963 = vmatprep.mubr.bf16.mxu0 %v485
        %964 = vmatmul.mubr.bf16.gmra.mrb[0].mxu0 %v484
        %v965 = vpop.f32.mrb[0].mxu0
        %v966 = vadd.f32 %v773, %v965
        %v967 = vpop.f32.mrb[0].mxu0
        %v968 = vadd.f32 %v775, %v967
        %v969 = vpop.f32.mrb[0].mxu0
        %v970 = vadd.f32 %v777, %v969
        %v971 = vpop.f32.mrb[0].mxu0
        %v972 = vadd.f32 %v779, %v971
        %973 = vmatprep.mubr.bf16.mxu0 %v489
        %974 = vmatmul.mubr.bf16.gmra.mrb[0].mxu0 %v488
        %v975 = vpop.f32.mrb[0].mxu0
        %v976 = vadd.f32 %v783, %v975
        %v977 = vpop.f32.mrb[0].mxu0
        %v978 = vadd.f32 %v785, %v977
        %v979 = vpop.f32.mrb[0].mxu0
        %v980 = vadd.f32 %v787, %v979
        %v981 = vpop.f32.mrb[0].mxu0
        %v982 = vadd.f32 %v789, %v981
        %983 = vmatprep.mubr.bf16.mxu0 %v493
        %984 = vmatmul.mubr.bf16.gmra.mrb[0].mxu0 %v492
        %v985 = vpop.f32.mrb[0].mxu0
        %v986 = vadd.f32 %v793, %v985
        %v987 = vpop.f32.mrb[0].mxu0
        %v988 = vadd.f32 %v795, %v987
        %v989 = vpop.f32.mrb[0].mxu0
        %v990 = vadd.f32 %v797, %v989
        %v991 = vpop.f32.mrb[0].mxu0
        %v992 = vadd.f32 %v799, %v991
        %993 = vmatprep.mubr.bf16.mxu0 %v497
        %994 = vmatmul.mubr.bf16.gmra.mrb[0].mxu0 %v496
        %v995 = vpop.f32.mrb[0].mxu0
        %v996 = vadd.f32 %v803, %v995
        %v997 = vpop.f32.mrb[0].mxu0
        %v998 = vadd.f32 %v805, %v997
        %v999 = vpop.f32.mrb[0].mxu0
        %v1000 = vadd.f32 %v807, %v999
        %v1001 = vpop.f32.mrb[0].mxu0
        %v1002 = vadd.f32 %v809, %v1001
        %1003 = vmatprep.mubr.bf16.mxu0 %v501
        %1004 = vmatmul.mubr.bf16.gmra.mrb[0].mxu0 %v500
        %v1005 = vpop.f32.mrb[0].mxu0
        %v1006 = vadd.f32 %v813, %v1005
        %v1007 = vpop.f32.mrb[0].mxu0
        %v1008 = vadd.f32 %v815, %v1007
        %v1009 = vpop.f32.mrb[0].mxu0
        %v1010 = vadd.f32 %v817, %v1009
        %v1011 = vpop.f32.mrb[0].mxu0
        %v1012 = vadd.f32 %v819, %v1011
        %1013 = vmatprep.mubr.bf16.mxu0 %v505
        %1014 = vmatmul.mubr.bf16.gmra.mrb[0].mxu0 %v504
        %v1015 = vpop.f32.mrb[0].mxu0
        %v1016 = vadd.f32 %v823, %v1015
        %v1017 = vpop.f32.mrb[0].mxu0
        %v1018 = vadd.f32 %v825, %v1017
        %v1019 = vpop.f32.mrb[0].mxu0
        %v1020 = vadd.f32 %v827, %v1019
        %v1021 = vpop.f32.mrb[0].mxu0
        %v1022 = vadd.f32 %v829, %v1021
        %1023 = vmatprep.mubr.bf16.mxu0 %v509
        %1024 = vmatmul.mubr.bf16.gmra.mrb[0].mxu0 %v508
        %v1025 = vpop.f32.mrb[0].mxu0
        %v1026 = vadd.f32 %v833, %v1025
        %v1027 = vpop.f32.mrb[0].mxu0
        %v1028 = vadd.f32 %v835, %v1027
        %v1029 = vpop.f32.mrb[0].mxu0
        %v1030 = vadd.f32 %v837, %v1029
        %v1031 = vpop.f32.mrb[0].mxu0
        %v1032 = vadd.f32 %v839, %v1031
        %1033 = vmatprep.mubr.bf16.mxu0 %v513
        %1034 = vmatmul.mubr.bf16.gmra.mrb[0].mxu0 %v512
        %v1035 = vpop.f32.mrb[0].mxu0
        %v1036 = vadd.f32 %v843, %v1035
        %v1037 = vpop.f32.mrb[0].mxu0
        %v1038 = vadd.f32 %v845, %v1037
        %v1039 = vpop.f32.mrb[0].mxu0
        %v1040 = vadd.f32 %v847, %v1039
        %v1041 = vpop.f32.mrb[0].mxu0
        %v1042 = vadd.f32 %v849, %v1041
        %1043 = vmatprep.mubr.bf16.mxu0 %v517
        %1044 = vmatmul.mubr.bf16.gmra.mrb[0].mxu0 %v516
        %v1045 = vpop.f32.mrb[0].mxu0
        %v1046 = vadd.f32 %v853, %v1045
        %v1047 = vpop.f32.mrb[0].mxu0
        %v1048 = vadd.f32 %v855, %v1047
        %v1049 = vpop.f32.mrb[0].mxu0
        %v1050 = vadd.f32 %v857, %v1049
        %v1051 = vpop.f32.mrb[0].mxu0
        %v1052 = vadd.f32 %v859, %v1051
        %1053 = vmatprep.mubr.bf16.mxu0 %v521
        %1054 = vmatmul.mubr.bf16.gmra.mrb[0].mxu0 %v520
        %v1055 = vpop.f32.mrb[0].mxu0
        %v1056 = vadd.f32 %v863, %v1055
        %v1057 = vpop.f32.mrb[0].mxu0
        %v1058 = vadd.f32 %v865, %v1057
        %v1059 = vpop.f32.mrb[0].mxu0
        %v1060 = vadd.f32 %v867, %v1059
        %v1061 = vpop.f32.mrb[0].mxu0
        %v1062 = vadd.f32 %v869, %v1061
        %1063 = vmatprep.mubr.bf16.mxu0 %v525
        %1064 = vmatmul.mubr.bf16.gmra.mrb[0].mxu0 %v524
        %v1065 = vpop.f32.mrb[0].mxu0
        %v1066 = vadd.f32 %v873, %v1065
        %v1067 = vpop.f32.mrb[0].mxu0
        %v1068 = vadd.f32 %v875, %v1067
        %v1069 = vpop.f32.mrb[0].mxu0
        %v1070 = vadd.f32 %v877, %v1069
        %v1071 = vpop.f32.mrb[0].mxu0
        %v1072 = vadd.f32 %v879, %v1071
        %1073 = vmatprep.mubr.bf16.mxu0 %v529
        %1074 = vmatmul.mubr.bf16.gmra.mrb[0].mxu0 %v528
        %v1075 = vpop.f32.mrb[0].mxu0
        %v1076 = vadd.f32 %v883, %v1075
        %v1077 = vpop.f32.mrb[0].mxu0
        %v1078 = vadd.f32 %v885, %v1077
        %v1079 = vpop.f32.mrb[0].mxu0
        %v1080 = vadd.f32 %v887, %v1079
        %v1081 = vpop.f32.mrb[0].mxu0
        %v1082 = vadd.f32 %v889, %v1081
        %1083 = vmatprep.mubr.bf16.mxu0 %v533
        %1084 = vmatmul.mubr.bf16.gmra.mrb[0].mxu0 %v532
        %v1085 = vpop.f32.mrb[0].mxu0
        %v1086 = vadd.f32 %v893, %v1085
        %v1087 = vpop.f32.mrb[0].mxu0
        %v1088 = vadd.f32 %v895, %v1087
        %v1089 = vpop.f32.mrb[0].mxu0
        %v1090 = vadd.f32 %v897, %v1089
        %v1091 = vpop.f32.mrb[0].mxu0
        %v1092 = vadd.f32 %v899, %v1091
        %1093 = vmatprep.mubr.bf16.mxu0 %v537
        %1094 = vmatmul.mubr.bf16.gmra.mrb[0].mxu0 %v536
        %v1095 = vpop.f32.mrb[0].mxu0
        %v1096 = vadd.f32 %v903, %v1095
        %v1097 = vpop.f32.mrb[0].mxu0
        %v1098 = vadd.f32 %v905, %v1097
        %v1099 = vpop.f32.mrb[0].mxu0
        %v1100 = vadd.f32 %v907, %v1099
        %v1101 = vpop.f32.mrb[0].mxu0
        %v1102 = vadd.f32 %v909, %v1101
        %1103 = vmatprep.mubr.bf16.mxu0 %v541
        %1104 = vmatmul.mubr.bf16.gmra.mrb[0].mxu0 %v540
        %v1105 = vpop.f32.mrb[0].mxu0
        %v1106 = vadd.f32 %v913, %v1105
        %v1107 = vpop.f32.mrb[0].mxu0
        %v1108 = vadd.f32 %v915, %v1107
        %v1109 = vpop.f32.mrb[0].mxu0
        %v1110 = vadd.f32 %v917, %v1109
        %v1111 = vpop.f32.mrb[0].mxu0
        %v1112 = vadd.f32 %v919, %v1111
        %1113 = vmatprep.mubr.bf16.mxu0 %v545
        %1114 = vmatmul.mubr.bf16.gmra.mrb[0].mxu0 %v544
        %v1115 = vpop.f32.mrb[0].mxu0
        %v1116 = vadd.f32 %v923, %v1115
        %v1117 = vpop.f32.mrb[0].mxu0
        %v1118 = vadd.f32 %v925, %v1117
        %v1119 = vpop.f32.mrb[0].mxu0
        %v1120 = vadd.f32 %v927, %v1119
        %v1121 = vpop.f32.mrb[0].mxu0
        %v1122 = vadd.f32 %v929, %v1121
        %1123 = vdwg.mxu0
        %v1124 = vadd.f32 %v290, %v966
        %v1125 = vadd.f32 %v291, %v968
        %v1126 = vadd.f32 %v292, %v970
        %v1127 = vadd.f32 %v293, %v972
        %v1128 = vadd.f32 %v294, %v976
        %v1129 = vadd.f32 %v295, %v978
        %v1130 = vadd.f32 %v296, %v980
        %v1131 = vadd.f32 %v297, %v982
        %v1132 = vadd.f32 %v298, %v986
        %v1133 = vadd.f32 %v299, %v988
        %v1134 = vadd.f32 %v300, %v990
        %v1135 = vadd.f32 %v301, %v992
        %v1136 = vadd.f32 %v302, %v996
        %v1137 = vadd.f32 %v303, %v998
        %v1138 = vadd.f32 %v304, %v1000
        %v1139 = vadd.f32 %v305, %v1002
        %v1140 = vadd.f32 %v306, %v1006
        %v1141 = vadd.f32 %v307, %v1008
        %v1142 = vadd.f32 %v308, %v1010
        %v1143 = vadd.f32 %v309, %v1012
        %v1144 = vadd.f32 %v310, %v1016
        %v1145 = vadd.f32 %v311, %v1018
        %v1146 = vadd.f32 %v312, %v1020
        %v1147 = vadd.f32 %v313, %v1022
        %v1148 = vadd.f32 %v314, %v1026
        %v1149 = vadd.f32 %v315, %v1028
        %v1150 = vadd.f32 %v316, %v1030
        %v1151 = vadd.f32 %v317, %v1032
        %v1152 = vadd.f32 %v318, %v1036
        %v1153 = vadd.f32 %v319, %v1038
        %v1154 = vadd.f32 %v320, %v1040
        %v1155 = vadd.f32 %v321, %v1042
        %v1156 = vadd.f32 %v322, %v1046
        %v1157 = vadd.f32 %v323, %v1048
        %v1158 = vadd.f32 %v324, %v1050
        %v1159 = vadd.f32 %v325, %v1052
        %v1160 = vadd.f32 %v326, %v1056
        %v1161 = vadd.f32 %v327, %v1058
        %v1162 = vadd.f32 %v328, %v1060
        %v1163 = vadd.f32 %v329, %v1062
        %v1164 = vadd.f32 %v330, %v1066
        %v1165 = vadd.f32 %v331, %v1068
        %v1166 = vadd.f32 %v332, %v1070
        %v1167 = vadd.f32 %v333, %v1072
        %v1168 = vadd.f32 %v334, %v1076
        %v1169 = vadd.f32 %v335, %v1078
        %v1170 = vadd.f32 %v336, %v1080
        %v1171 = vadd.f32 %v337, %v1082
        %v1172 = vadd.f32 %v338, %v1086
        %v1173 = vadd.f32 %v339, %v1088
        %v1174 = vadd.f32 %v340, %v1090
        %v1175 = vadd.f32 %v341, %v1092
        %v1176 = vadd.f32 %v342, %v1096
        %v1177 = vadd.f32 %v343, %v1098
        %v1178 = vadd.f32 %v344, %v1100
        %v1179 = vadd.f32 %v345, %v1102
        %v1180 = vadd.f32 %v346, %v1106
        %v1181 = vadd.f32 %v347, %v1108
        %v1182 = vadd.f32 %v348, %v1110
        %v1183 = vadd.f32 %v349, %v1112
        %v1184 = vadd.f32 %v350, %v1116
        %v1185 = vadd.f32 %v351, %v1118
        %v1186 = vadd.f32 %v352, %v1120
        %v1187 = vadd.f32 %v353, %v1122
        %1188 = vst [vmem:[#allocation2] sm:$0xff] %v1124
        %1189 = vst [vmem:[#allocation2 + $0x8] sm:$0xff] %v1125
        %1190 = vst [vmem:[#allocation2 + $0x10] sm:$0xff] %v1126
        %1191 = vst [vmem:[#allocation2 + $0x18] sm:$0xff] %v1127
        %1192 = vst [vmem:[#allocation2 + $0x20] sm:$0xff] %v1128
        %1193 = vst [vmem:[#allocation2 + $0x28] sm:$0xff] %v1129
        %1194 = vst [vmem:[#allocation2 + $0x30] sm:$0xff] %v1130
        %1195 = vst [vmem:[#allocation2 + $0x38] sm:$0xff] %v1131
        %1196 = vst [vmem:[#allocation2 + $0x40] sm:$0xff] %v1132
        %1197 = vst [vmem:[#allocation2 + $0x48] sm:$0xff] %v1133
        %1198 = vst [vmem:[#allocation2 + $0x50] sm:$0xff] %v1134
        %1199 = vst [vmem:[#allocation2 + $0x58] sm:$0xff] %v1135
        %1200 = vst [vmem:[#allocation2 + $0x60] sm:$0xff] %v1136
        %1201 = vst [vmem:[#allocation2 + $0x68] sm:$0xff] %v1137
        %1202 = vst [vmem:[#allocation2 + $0x70] sm:$0xff] %v1138
        %1203 = vst [vmem:[#allocation2 + $0x78] sm:$0xff] %v1139
        %1204 = vst [vmem:[#allocation2 + $0x80] sm:$0xff] %v1140
        %1205 = vst [vmem:[#allocation2 + $0x88] sm:$0xff] %v1141
        %1206 = vst [vmem:[#allocation2 + $0x90] sm:$0xff] %v1142
        %1207 = vst [vmem:[#allocation2 + $0x98] sm:$0xff] %v1143
        %1208 = vst [vmem:[#allocation2 + $0xa0] sm:$0xff] %v1144
        %1209 = vst [vmem:[#allocation2 + $0xa8] sm:$0xff] %v1145
        %1210 = vst [vmem:[#allocation2 + $0xb0] sm:$0xff] %v1146
        %1211 = vst [vmem:[#allocation2 + $0xb8] sm:$0xff] %v1147
        %1212 = vst [vmem:[#allocation2 + $0xc0] sm:$0xff] %v1148
        %1213 = vst [vmem:[#allocation2 + $0xc8] sm:$0xff] %v1149
        %1214 = vst [vmem:[#allocation2 + $0xd0] sm:$0xff] %v1150
        %1215 = vst [vmem:[#allocation2 + $0xd8] sm:$0xff] %v1151
        %1216 = vst [vmem:[#allocation2 + $0xe0] sm:$0xff] %v1152
        %1217 = vst [vmem:[#allocation2 + $0xe8] sm:$0xff] %v1153
        %1218 = vst [vmem:[#allocation2 + $0xf0] sm:$0xff] %v1154
        %1219 = vst [vmem:[#allocation2 + $0xf8] sm:$0xff] %v1155
        %1220 = vst [vmem:[#allocation2 + $0x100] sm:$0xff] %v1156
        %1221 = vst [vmem:[#allocation2 + $0x108] sm:$0xff] %v1157
        %1222 = vst [vmem:[#allocation2 + $0x110] sm:$0xff] %v1158
        %1223 = vst [vmem:[#allocation2 + $0x118] sm:$0xff] %v1159
        %1224 = vst [vmem:[#allocation2 + $0x120] sm:$0xff] %v1160
        %1225 = vst [vmem:[#allocation2 + $0x128] sm:$0xff] %v1161
        %1226 = vst [vmem:[#allocation2 + $0x130] sm:$0xff] %v1162
        %1227 = vst [vmem:[#allocation2 + $0x138] sm:$0xff] %v1163
        %1228 = vst [vmem:[#allocation2 + $0x140] sm:$0xff] %v1164
        %1229 = vst [vmem:[#allocation2 + $0x148] sm:$0xff] %v1165
        %1230 = vst [vmem:[#allocation2 + $0x150] sm:$0xff] %v1166
        %1231 = vst [vmem:[#allocation2 + $0x158] sm:$0xff] %v1167
        %1232 = vst [vmem:[#allocation2 + $0x160] sm:$0xff] %v1168
        %1233 = vst [vmem:[#allocation2 + $0x168] sm:$0xff] %v1169
        %1234 = vst [vmem:[#allocation2 + $0x170] sm:$0xff] %v1170
        %1235 = vst [vmem:[#allocation2 + $0x178] sm:$0xff] %v1171
        %1236 = vst [vmem:[#allocation2 + $0x180] sm:$0xff] %v1172
        %1237 = vst [vmem:[#allocation2 + $0x188] sm:$0xff] %v1173
        %1238 = vst [vmem:[#allocation2 + $0x190] sm:$0xff] %v1174
        %1239 = vst [vmem:[#allocation2 + $0x198] sm:$0xff] %v1175
        %1240 = vst [vmem:[#allocation2 + $0x1a0] sm:$0xff] %v1176
        %1241 = vst [vmem:[#allocation2 + $0x1a8] sm:$0xff] %v1177
        %1242 = vst [vmem:[#allocation2 + $0x1b0] sm:$0xff] %v1178
        %1243 = vst [vmem:[#allocation2 + $0x1b8] sm:$0xff] %v1179
        %1244 = vst [vmem:[#allocation2 + $0x1c0] sm:$0xff] %v1180
        %1245 = vst [vmem:[#allocation2 + $0x1c8] sm:$0xff] %v1181
        %1246 = vst [vmem:[#allocation2 + $0x1d0] sm:$0xff] %v1182
        %1247 = vst [vmem:[#allocation2 + $0x1d8] sm:$0xff] %v1183
        %1248 = vst [vmem:[#allocation2 + $0x1e0] sm:$0xff] %v1184
        %1249 = vst [vmem:[#allocation2 + $0x1e8] sm:$0xff] %v1185
        %1250 = vst [vmem:[#allocation2 + $0x1f0] sm:$0xff] %v1186
        %1251 = vst [vmem:[#allocation2 + $0x1f8] sm:$0xff] %v1187
        // Predicated region
        $region41: #{tpu_custom_call.1} parent=27 // pred_check
          %p1252 = pneg %p222
        $region42: #{tpu_custom_call.1} parent=27 // pred_check_branch
          %1254 = sbr.rel (%p1252) target = $region44
        $region43: #{tpu_custom_call.1} parent=27 // pred_region
          %v1255 = vld [vmem:[#allocation2] sm:$0xff]
          %v1256 = vld [vmem:[#allocation2 + $0x8] sm:$0xff]
          %v1257 = vld [vmem:[#allocation2 + $0x10] sm:$0xff]
          %v1258 = vld [vmem:[#allocation2 + $0x18] sm:$0xff]
          %v1259 = vld [vmem:[#allocation2 + $0x20] sm:$0xff]
          %v1260 = vld [vmem:[#allocation2 + $0x28] sm:$0xff]
          %v1261 = vld [vmem:[#allocation2 + $0x30] sm:$0xff]
          %v1262 = vld [vmem:[#allocation2 + $0x38] sm:$0xff]
          %v1263 = vld [vmem:[#allocation2 + $0x40] sm:$0xff]
          %v1264 = vld [vmem:[#allocation2 + $0x48] sm:$0xff]
          %v1265 = vld [vmem:[#allocation2 + $0x50] sm:$0xff]
          %v1266 = vld [vmem:[#allocation2 + $0x58] sm:$0xff]
          %v1267 = vld [vmem:[#allocation2 + $0x60] sm:$0xff]
          %v1268 = vld [vmem:[#allocation2 + $0x68] sm:$0xff]
          %v1269 = vld [vmem:[#allocation2 + $0x70] sm:$0xff]
          %v1270 = vld [vmem:[#allocation2 + $0x78] sm:$0xff]
          %v1271 = vld [vmem:[#allocation2 + $0x80] sm:$0xff]
          %v1272 = vld [vmem:[#allocation2 + $0x88] sm:$0xff]
          %v1273 = vld [vmem:[#allocation2 + $0x90] sm:$0xff]
          %v1274 = vld [vmem:[#allocation2 + $0x98] sm:$0xff]
          %v1275 = vld [vmem:[#allocation2 + $0xa0] sm:$0xff]
          %v1276 = vld [vmem:[#allocation2 + $0xa8] sm:$0xff]
          %v1277 = vld [vmem:[#allocation2 + $0xb0] sm:$0xff]
          %v1278 = vld [vmem:[#allocation2 + $0xb8] sm:$0xff]
          %v1279 = vld [vmem:[#allocation2 + $0xc0] sm:$0xff]
          %v1280 = vld [vmem:[#allocation2 + $0xc8] sm:$0xff]
          %v1281 = vld [vmem:[#allocation2 + $0xd0] sm:$0xff]
          %v1282 = vld [vmem:[#allocation2 + $0xd8] sm:$0xff]
          %v1283 = vld [vmem:[#allocation2 + $0xe0] sm:$0xff]
          %v1284 = vld [vmem:[#allocation2 + $0xe8] sm:$0xff]
          %v1285 = vld [vmem:[#allocation2 + $0xf0] sm:$0xff]
          %v1286 = vld [vmem:[#allocation2 + $0xf8] sm:$0xff]
          %v1287 = vld [vmem:[#allocation2 + $0x100] sm:$0xff]
          %v1288 = vld [vmem:[#allocation2 + $0x108] sm:$0xff]
          %v1289 = vld [vmem:[#allocation2 + $0x110] sm:$0xff]
          %v1290 = vld [vmem:[#allocation2 + $0x118] sm:$0xff]
          %v1291 = vld [vmem:[#allocation2 + $0x120] sm:$0xff]
          %v1292 = vld [vmem:[#allocation2 + $0x128] sm:$0xff]
          %v1293 = vld [vmem:[#allocation2 + $0x130] sm:$0xff]
          %v1294 = vld [vmem:[#allocation2 + $0x138] sm:$0xff]
          %v1295 = vld [vmem:[#allocation2 + $0x140] sm:$0xff]
          %v1296 = vld [vmem:[#allocation2 + $0x148] sm:$0xff]
          %v1297 = vld [vmem:[#allocation2 + $0x150] sm:$0xff]
          %v1298 = vld [vmem:[#allocation2 + $0x158] sm:$0xff]
          %v1299 = vld [vmem:[#allocation2 + $0x160] sm:$0xff]
          %v1300 = vld [vmem:[#allocation2 + $0x168] sm:$0xff]
          %v1301 = vld [vmem:[#allocation2 + $0x170] sm:$0xff]
          %v1302 = vld [vmem:[#allocation2 + $0x178] sm:$0xff]
          %v1303 = vld [vmem:[#allocation2 + $0x180] sm:$0xff]
          %v1304 = vld [vmem:[#allocation2 + $0x188] sm:$0xff]
          %v1305 = vld [vmem:[#allocation2 + $0x190] sm:$0xff]
          %v1306 = vld [vmem:[#allocation2 + $0x198] sm:$0xff]
          %v1307 = vld [vmem:[#allocation2 + $0x1a0] sm:$0xff]
          %v1308 = vld [vmem:[#allocation2 + $0x1a8] sm:$0xff]
          %v1309 = vld [vmem:[#allocation2 + $0x1b0] sm:$0xff]
          %v1310 = vld [vmem:[#allocation2 + $0x1b8] sm:$0xff]
          %v1311 = vld [vmem:[#allocation2 + $0x1c0] sm:$0xff]
          %v1312 = vld [vmem:[#allocation2 + $0x1c8] sm:$0xff]
          %v1313 = vld [vmem:[#allocation2 + $0x1d0] sm:$0xff]
          %v1314 = vld [vmem:[#allocation2 + $0x1d8] sm:$0xff]
          %v1315 = vld [vmem:[#allocation2 + $0x1e0] sm:$0xff]
          %v1316 = vld [vmem:[#allocation2 + $0x1e8] sm:$0xff]
          %v1317 = vld [vmem:[#allocation2 + $0x1f0] sm:$0xff]
          %v1318 = vld [vmem:[#allocation2 + $0x1f8] sm:$0xff]
          %1319 = vst [vmem:[%s215] sm:$0xff] %v1255
          %1320 = vst [vmem:[%s215 + $0x8] sm:$0xff] %v1256
          %1321 = vst [vmem:[%s215 + $0x10] sm:$0xff] %v1257
          %1322 = vst [vmem:[%s215 + $0x18] sm:$0xff] %v1258
          %1323 = vst [vmem:[%s215 + $0x20] sm:$0xff] %v1259
          %1324 = vst [vmem:[%s215 + $0x28] sm:$0xff] %v1260
          %1325 = vst [vmem:[%s215 + $0x30] sm:$0xff] %v1261
          %1326 = vst [vmem:[%s215 + $0x38] sm:$0xff] %v1262
          %1327 = vst [vmem:[%s215 + $0x40] sm:$0xff] %v1263
          %1328 = vst [vmem:[%s215 + $0x48] sm:$0xff] %v1264
          %1329 = vst [vmem:[%s215 + $0x50] sm:$0xff] %v1265
          %1330 = vst [vmem:[%s215 + $0x58] sm:$0xff] %v1266
          %1331 = vst [vmem:[%s215 + $0x60] sm:$0xff] %v1267
          %1332 = vst [vmem:[%s215 + $0x68] sm:$0xff] %v1268
          %1333 = vst [vmem:[%s215 + $0x70] sm:$0xff] %v1269
          %1334 = vst [vmem:[%s215 + $0x78] sm:$0xff] %v1270
          %1335 = vst [vmem:[%s215 + $0x80] sm:$0xff] %v1271
          %1336 = vst [vmem:[%s215 + $0x88] sm:$0xff] %v1272
          %1337 = vst [vmem:[%s215 + $0x90] sm:$0xff] %v1273
          %1338 = vst [vmem:[%s215 + $0x98] sm:$0xff] %v1274
          %1339 = vst [vmem:[%s215 + $0xa0] sm:$0xff] %v1275
          %1340 = vst [vmem:[%s215 + $0xa8] sm:$0xff] %v1276
          %1341 = vst [vmem:[%s215 + $0xb0] sm:$0xff] %v1277
          %1342 = vst [vmem:[%s215 + $0xb8] sm:$0xff] %v1278
          %1343 = vst [vmem:[%s215 + $0xc0] sm:$0xff] %v1279
          %1344 = vst [vmem:[%s215 + $0xc8] sm:$0xff] %v1280
          %1345 = vst [vmem:[%s215 + $0xd0] sm:$0xff] %v1281
          %1346 = vst [vmem:[%s215 + $0xd8] sm:$0xff] %v1282
          %1347 = vst [vmem:[%s215 + $0xe0] sm:$0xff] %v1283
          %1348 = vst [vmem:[%s215 + $0xe8] sm:$0xff] %v1284
          %1349 = vst [vmem:[%s215 + $0xf0] sm:$0xff] %v1285
          %1350 = vst [vmem:[%s215 + $0xf8] sm:$0xff] %v1286
          %1351 = vst [vmem:[%s215 + $0x100] sm:$0xff] %v1287
          %1352 = vst [vmem:[%s215 + $0x108] sm:$0xff] %v1288
          %1353 = vst [vmem:[%s215 + $0x110] sm:$0xff] %v1289
          %1354 = vst [vmem:[%s215 + $0x118] sm:$0xff] %v1290
          %1355 = vst [vmem:[%s215 + $0x120] sm:$0xff] %v1291
          %1356 = vst [vmem:[%s215 + $0x128] sm:$0xff] %v1292
          %1357 = vst [vmem:[%s215 + $0x130] sm:$0xff] %v1293
          %1358 = vst [vmem:[%s215 + $0x138] sm:$0xff] %v1294
          %1359 = vst [vmem:[%s215 + $0x140] sm:$0xff] %v1295
          %1360 = vst [vmem:[%s215 + $0x148] sm:$0xff] %v1296
          %1361 = vst [vmem:[%s215 + $0x150] sm:$0xff] %v1297
          %1362 = vst [vmem:[%s215 + $0x158] sm:$0xff] %v1298
          %1363 = vst [vmem:[%s215 + $0x160] sm:$0xff] %v1299
          %1364 = vst [vmem:[%s215 + $0x168] sm:$0xff] %v1300
          %1365 = vst [vmem:[%s215 + $0x170] sm:$0xff] %v1301
          %1366 = vst [vmem:[%s215 + $0x178] sm:$0xff] %v1302
          %1367 = vst [vmem:[%s215 + $0x180] sm:$0xff] %v1303
          %1368 = vst [vmem:[%s215 + $0x188] sm:$0xff] %v1304
          %1369 = vst [vmem:[%s215 + $0x190] sm:$0xff] %v1305
          %1370 = vst [vmem:[%s215 + $0x198] sm:$0xff] %v1306
          %1371 = vst [vmem:[%s215 + $0x1a0] sm:$0xff] %v1307
          %1372 = vst [vmem:[%s215 + $0x1a8] sm:$0xff] %v1308
          %1373 = vst [vmem:[%s215 + $0x1b0] sm:$0xff] %v1309
          %1374 = vst [vmem:[%s215 + $0x1b8] sm:$0xff] %v1310
          %1375 = vst [vmem:[%s215 + $0x1c0] sm:$0xff] %v1311
          %1376 = vst [vmem:[%s215 + $0x1c8] sm:$0xff] %v1312
          %1377 = vst [vmem:[%s215 + $0x1d0] sm:$0xff] %v1313
          %1378 = vst [vmem:[%s215 + $0x1d8] sm:$0xff] %v1314
          %1379 = vst [vmem:[%s215 + $0x1e0] sm:$0xff] %v1315
          %1380 = vst [vmem:[%s215 + $0x1e8] sm:$0xff] %v1316
          %1381 = vst [vmem:[%s215 + $0x1f0] sm:$0xff] %v1317
          %1382 = vst [vmem:[%s215 + $0x1f8] sm:$0xff] %v1318
        $region44: #{tpu_custom_call.1} parent=27 // pred_fallthru
          _
        %s1383 = sand.u32 %s105, 1
        %s1384 = scalar_lea.sflag [#allocation5], %s1383
        %s1385 = sand.u32 %s105, 1
        %s1386 = smul.addr %s1385, 512
        %s1387 = scalar_lea.vmem [#allocation8], %s1386
        // Predicated region
        $region45: #{tpu_custom_call.1} parent=27 // pred_check
          %p1388 = pneg %p115
        $region46: #{tpu_custom_call.1} parent=27 // pred_check_branch
          %1390 = sbr.rel (%p1388) target = $region48
        $region47: #{tpu_custom_call.1} parent=27 // pred_region
          %s1391 = smul.u32 32, %s25
          %s1392 = smul.u32 2, %s26
          %s1394 = ssub.s32 8192, 8192
          %1395 = vsyncadd %s1384, %s1394
          %s1396 = smul.addr %s1391, 4
          %s1397 = sadd.s32 %s1392, %s1396
          %s1398 = smul.addr %s1397, 128
          %s1399 = scalar_lea.hbm %s2, %s1398
          %s1400 = sshll.u32 %s1387, 4
          %s1401 = int_to_ptr.vmem [resolvable:$true] %s1400
          %1406 = dma.vmem_to_hbm [thread:$0]  %s1401, 8192, %s1399, %s1384, 256, 512, 16
        $region48: #{tpu_custom_call.1} parent=27 // pred_fallthru
          _
      $region28: #{tpu_custom_call.1} parent=5 // pred_fallthru
        _
      %p1407 = scmp.le.s32.totalorder 2, %s15
      // Predicated region
      $region49: #{tpu_custom_call.1} parent=5 // pred_check
        %p1408 = pneg %p1407
      $region50: #{tpu_custom_call.1} parent=5 // pred_check_branch
        %1410 = sbr.rel (%p1408) target = $region52
      $region51: #{tpu_custom_call.1} parent=5 // pred_region
        %s1411 = ssub.s32 %s15, 2
        // Predicated region
        $region53: #{tpu_custom_call.1} parent=51 // pred_check
          %p1412 = pneg %p121
        $region54: #{tpu_custom_call.1} parent=51 // pred_check_branch
          %1414 = sbr.rel (%p1412) target = $region56
        $region55: #{tpu_custom_call.1} parent=51 // pred_region
          %s1415 = sand.u32 %s106, 1
          %s1416 = scalar_lea.sflag [#allocation5], %s1415
          %s1417 = sand.u32 %s106, 1
          %s1418 = smul.addr %s1417, 512
          %s1419 = scalar_lea.vmem [#allocation8], %s1418
          %1420 = dma.done %s1416, 8192
        $region56: #{tpu_custom_call.1} parent=51 // pred_fallthru
          _
      $region52: #{tpu_custom_call.1} parent=5 // pred_fallthru
        _
    $region6: #{tpu_custom_call.1} parent=1 // loop_footer
      %s19 = sadd.s32 1, %s15
    $region7: #{tpu_custom_call.1} parent=1 // loop_footer_branch
      %14 = sbr.rel target = $region3
    $region8: #{tpu_custom_call.1} parent=1 // loop_exit
      _
    %1421 = vsyncpa [#allocation4], 1
    %s1422 = scalar_lea.sflag [#allocation4], 1
    %1423 = vsyncpa %s1422, 1
    %1424 = vsyncpa [#allocation7], 1
    %s1425 = scalar_lea.sflag [#allocation7], 1
    %1426 = vsyncpa %s1425, 1
    %1427 = vsyncpa [#allocation5], 1
    %s1428 = scalar_lea.sflag [#allocation5], 1
    %1429 = vsyncpa %s1428, 1

</llo_original>
